<compile_context>
chip_gen: v5e
topology: v5e:2x2
jax: 0.10.0
libtpu: 0.0.40
codegen_flags: <defaults>
</compile_context>

<pallas_src>
import functools
import math

import jax
import jax.numpy as jnp
from jax import lax
from jax.experimental import pallas as pl
from jax.experimental.pallas import tpu as pltpu

_VMEM_LIMIT = 32 * 1024 * 1024  # safe on v7x (64 MiB physical); tiles need only a few MiB


# ------------------------------ tile helpers -------------------------------

def _pick_tile(dim, cap, align):
    """Largest tile <= cap that divides `dim` and is `align`-aligned, else full dim."""
    if dim <= cap:
        return dim
    t = (cap // align) * align
    while t >= align:
        if dim % t == 0:
            return t
        t -= align
    return dim  # fallback: full dimension (always a legal block)


def _pick_heads_per_block(n_head, head_dim):
    """Smallest head-group so the attention block width is a multiple of 128
    (lane-dense loads/stores, full MXU N width); fall back to full C (always legal)."""
    for d in range(1, n_head + 1):
        if n_head % d == 0 and (d * head_dim) % 128 == 0:
            return d
    return n_head


# ------------------------------ linear kernel ------------------------------

def _linear_kernel(x_ref, w_ref, b_ref, o_ref, acc_ref):
    # x: (tm, tk), w: (tk, tn), b: (1, tn) f32, o: (tm, tn), acc: f32 (tm, tn)
    @pl.when(pl.program_id(2) == 0)
    def _init():
        acc_ref[...] = jnp.zeros_like(acc_ref)

    acc_ref[...] += jnp.dot(x_ref[...], w_ref[...],
                            preferred_element_type=jnp.float32)

    @pl.when(pl.program_id(2) == pl.num_programs(2) - 1)
    def _store():
        o_ref[...] = (acc_ref[...] + b_ref[...]).astype(o_ref.dtype)


def pallas_linear(x2d, w, b, *, out_dtype=None,
                  tm_cap=256, tn_cap=256, tk_cap=1024):
    """x2d: (M, K)  w: (K, N)  b: (N,) f32 -> (M, N), tiled + pipelined."""
    M, K = x2d.shape
    Kw, Nout = w.shape
    assert K == Kw
    out_dtype = out_dtype if out_dtype is not None else x2d.dtype

    tm = _pick_tile(M, tm_cap, 8)
    tn = _pick_tile(Nout, tn_cap, 128)
    tk = _pick_tile(K, tk_cap, 128)
    grid = (M // tm, Nout // tn, K // tk)  # reduction axis (K) last
    b2d = b.astype(jnp.float32).reshape(1, Nout)

    return pl.pallas_call(
        _linear_kernel,
        out_shape=jax.ShapeDtypeStruct((M, Nout), out_dtype),
        grid_spec=pltpu.PrefetchScalarGridSpec(
            num_scalar_prefetch=0,
            grid=grid,
            in_specs=[
                pl.BlockSpec((tm, tk), lambda i, j, k: (i, k)),
                pl.BlockSpec((tk, tn), lambda i, j, k: (k, j)),
                pl.BlockSpec((1, tn), lambda i, j, k: (0, j)),
            ],
            out_specs=pl.BlockSpec((tm, tn), lambda i, j, k: (i, j)),
            scratch_shapes=[pltpu.VMEM((tm, tn), jnp.float32)],
        ),
        compiler_params=pltpu.CompilerParams(
            dimension_semantics=("parallel", "parallel", "arbitrary"),
            vmem_limit_bytes=_VMEM_LIMIT,
        ),
    )(x2d, w, b2d)


# -------------------------- fused K/V projection ---------------------------

def _kv_linear_kernel(x_ref, wk_ref, wv_ref, bk_ref, bv_ref,
                      k_out, v_out, acck_ref, accv_ref):
    # One read of x per step feeds BOTH the K and V matmuls (z read from HBM once).
    @pl.when(pl.program_id(2) == 0)
    def _init():
        acck_ref[...] = jnp.zeros_like(acck_ref)
        accv_ref[...] = jnp.zeros_like(accv_ref)

    x_blk = x_ref[...]
    acck_ref[...] += jnp.dot(x_blk, wk_ref[...], preferred_element_type=jnp.float32)
    accv_ref[...] += jnp.dot(x_blk, wv_ref[...], preferred_element_type=jnp.float32)

    @pl.when(pl.program_id(2) == pl.num_programs(2) - 1)
    def _store():
        k_out[...] = (acck_ref[...] + bk_ref[...]).astype(k_out.dtype)
        v_out[...] = (accv_ref[...] + bv_ref[...]).astype(v_out.dtype)


def pallas_kv_linear(z2d, wk, bk, wv, bv, *, out_dtype=None,
                     tm_cap=256, tn_cap=256, tk_cap=1024):
    """Fused c_attn: z2d (M, K) x {wk, wv} (K, C) -> (k (M, C), v (M, C))."""
    M, K = z2d.shape
    _, Cout = wk.shape
    out_dtype = out_dtype if out_dtype is not None else z2d.dtype

    tm = _pick_tile(M, tm_cap, 8)
    tn = _pick_tile(Cout, tn_cap, 128)
    tk = _pick_tile(K, tk_cap, 128)
    grid = (M // tm, Cout // tn, K // tk)
    bk2 = bk.astype(jnp.float32).reshape(1, Cout)
    bv2 = bv.astype(jnp.float32).reshape(1, Cout)

    return pl.pallas_call(
        _kv_linear_kernel,
        out_shape=(jax.ShapeDtypeStruct((M, Cout), out_dtype),
                   jax.ShapeDtypeStruct((M, Cout), out_dtype)),
        grid_spec=pltpu.PrefetchScalarGridSpec(
            num_scalar_prefetch=0,
            grid=grid,
            in_specs=[
                pl.BlockSpec((tm, tk), lambda i, j, k: (i, k)),
                pl.BlockSpec((tk, tn), lambda i, j, k: (k, j)),
                pl.BlockSpec((tk, tn), lambda i, j, k: (k, j)),
                pl.BlockSpec((1, tn), lambda i, j, k: (0, j)),
                pl.BlockSpec((1, tn), lambda i, j, k: (0, j)),
            ],
            out_specs=[pl.BlockSpec((tm, tn), lambda i, j, k: (i, j)),
                       pl.BlockSpec((tm, tn), lambda i, j, k: (i, j))],
            scratch_shapes=[pltpu.VMEM((tm, tn), jnp.float32),
                            pltpu.VMEM((tm, tn), jnp.float32)],
        ),
        compiler_params=pltpu.CompilerParams(
            dimension_semantics=("parallel", "parallel", "arbitrary"),
            vmem_limit_bytes=_VMEM_LIMIT,
        ),
    )(z2d, wk, wv, bk2, bv2)


# -------------------------- flash attention kernel --------------------------

def _flash_attn_kernel(q_ref, k_ref, v_ref, o_ref, m_sc, l_sc, acc_sc,
                       *, head_dim, heads):
    # q_ref: (1, tq, heads*hd), k_ref/v_ref: (1, tkv, heads*hd), o_ref: (1, tq, heads*hd)
    # m_sc/l_sc: (heads, tq, 1) f32, acc_sc: (heads, tq, hd) f32. KV axis is grid dim 3.
    kv_i = pl.program_id(3)

    @pl.when(kv_i == 0)
    def _init():
        m_sc[...] = jnp.full_like(m_sc, -jnp.inf)
        l_sc[...] = jnp.zeros_like(l_sc)
        acc_sc[...] = jnp.zeros_like(acc_sc)

    for h in range(heads):  # small static loop over heads within the group
        lo = h * head_dim
        hi = lo + head_dim
        q_h = q_ref[0, :, lo:hi]          # (tq, hd); 1/sqrt(hd) folded into Q weights
        k_h = k_ref[0, :, lo:hi]          # (tkv, hd)
        v_h = v_ref[0, :, lo:hi]          # (tkv, hd)

        # QK^T contracting the last dims directly — no k.T relayout. f32 scores.
        s = lax.dot_general(q_h, k_h, (((1,), (1,)), ((), ())),
                            preferred_element_type=jnp.float32)   # (tq, tkv)

        m_prev = m_sc[h]                                           # (tq, 1)
        m_new = jnp.maximum(m_prev, jnp.max(s, axis=-1, keepdims=True))
        alpha = jnp.exp(m_prev - m_new)                            # (tq, 1)
        p = jnp.exp(s - m_new)                                     # (tq, tkv) f32
        l_sc[h] = alpha * l_sc[h] + jnp.sum(p, axis=-1, keepdims=True)
        pv = jnp.dot(p.astype(v_h.dtype), v_h,
                     preferred_element_type=jnp.float32)           # (tq, hd) f32
        acc_sc[h] = alpha * acc_sc[h] + pv
        m_sc[h] = m_new

    @pl.when(kv_i == pl.num_programs(3) - 1)
    def _store():
        # Exact normalization, single lane-dense store of the whole head-group slab.
        if heads == 1:
            o_ref[0] = (acc_sc[0] * (1.0 / l_sc[0])).astype(o_ref.dtype)
        else:
            cols = [acc_sc[h] * (1.0 / l_sc[h]) for h in range(heads)]
            o_ref[0] = jnp.concatenate(cols, axis=-1).astype(o_ref.dtype)


def pallas_flash_attention(q3, k3, v3, n_head, *, tq_cap=256, tkv_cap=512):
    """q3: (B, T, C), k3/v3: (B, N, C) -> (B, T, C). Heads are column slabs of C;
    head split/merge lives entirely in the BlockSpec index_maps.  Online-softmax
    over the KV grid axis keeps VMEM independent of N."""
    B, T, C = q3.shape
    _, N, _ = k3.shape
    hd = C // n_head
    hpb = _pick_heads_per_block(n_head, hd)      # heads per grid step
    G = n_head // hpb
    bw = hpb * hd                                # block width along C

    tq = _pick_tile(T, tq_cap, 8)
    tkv = _pick_tile(N, tkv_cap, 8)

    kernel = functools.partial(_flash_attn_kernel, head_dim=hd, heads=hpb)
    return pl.pallas_call(
        kernel,
        out_shape=jax.ShapeDtypeStruct((B, T, C), q3.dtype),
        grid_spec=pltpu.PrefetchScalarGridSpec(
            num_scalar_prefetch=0,
            grid=(B, G, T // tq, N // tkv),       # KV (reduction) axis last
            in_specs=[
                pl.BlockSpec((1, tq, bw), lambda b, g, qi, kv: (b, qi, g)),
                pl.BlockSpec((1, tkv, bw), lambda b, g, qi, kv: (b, kv, g)),
                pl.BlockSpec((1, tkv, bw), lambda b, g, qi, kv: (b, kv, g)),
            ],
            out_specs=pl.BlockSpec((1, tq, bw), lambda b, g, qi, kv: (b, qi, g)),
            scratch_shapes=[
                pltpu.VMEM((hpb, tq, 1), jnp.float32),    # running max m
                pltpu.VMEM((hpb, tq, 1), jnp.float32),    # running denom l
                pltpu.VMEM((hpb, tq, hd), jnp.float32),   # running accumulator
            ],
        ),
        compiler_params=pltpu.CompilerParams(
            dimension_semantics=("parallel", "parallel", "parallel", "arbitrary"),
            vmem_limit_bytes=_VMEM_LIMIT,
        ),
    )(q3, k3, v3)


# ------------------------------- module glue -------------------------------

def init_params(key, n_embd):
    """Deterministic init mimicking nn.Linear uniform(-1/sqrt(in), 1/sqrt(in)).
    Weights stored as (in_features, out_features); c_attn stored pre-split."""
    ks = jax.random.split(key, 6)
    bound = 1.0 / math.sqrt(n_embd)

    def u(k, shape):
        return jax.random.uniform(k, shape, jnp.float32, -bound, bound)

    c_attn_w = u(ks[2], (n_embd, 2 * n_embd))
    c_attn_b = u(ks[3], (2 * n_embd,))
    return {
        "q_attn_w": u(ks[0], (n_embd, n_embd)),
        "q_attn_b": u(ks[1], (n_embd,)),
        # == torch's c_attn(z).split(n_embd, dim=2): first half -> K, second -> V
        "k_attn_w": c_attn_w[:, :n_embd],
        "k_attn_b": c_attn_b[:n_embd],
        "v_attn_w": c_attn_w[:, n_embd:],
        "v_attn_b": c_attn_b[n_embd:],
        "c_proj_w": u(ks[4], (n_embd, n_embd)),
        "c_proj_b": u(ks[5], (n_embd,)),
    }


def prepare_params(params, n_head, compute_dtype=jnp.float32):
    """Kernel-ready params: 1/sqrt(head_dim) folded into Q weights/bias, matmul
    weights cast to compute_dtype (bf16 on v6e/v7x/v5e for MXU speed), biases kept
    in f32 (added to the f32 accumulator inside the kernels)."""
    C = params["q_attn_w"].shape[0]
    scale = 1.0 / math.sqrt(C // n_head)
    dt = compute_dtype
    return {
        "q_w": (params["q_attn_w"] * scale).astype(dt),
        "q_b": (params["q_attn_b"] * scale).astype(jnp.float32),
        "k_w": params["k_attn_w"].astype(dt),
        "k_b": params["k_attn_b"].astype(jnp.float32),
        "v_w": params["v_attn_w"].astype(dt),
        "v_b": params["v_attn_b"].astype(jnp.float32),
        "proj_w": params["c_proj_w"].astype(dt),
        "proj_b": params["c_proj_b"].astype(jnp.float32),
    }


def causal_cross_attention(prep, x, z, n_head):
    """x: (B, T, C), z: (B, N, C) -> (B, T, C). Eval mode, use_cache=False path."""
    B, T, C = x.shape
    _, N, _ = z.shape
    dt = prep["q_w"].dtype

    xc = x.astype(dt).reshape(B * T, C)   # free reshapes (no transposes)
    zc = z.astype(dt).reshape(B * N, C)

    # Q projection (scale pre-folded); fused K/V projection (z read from HBM once).
    q = pallas_linear(xc, prep["q_w"], prep["q_b"])
    k, v = pallas_kv_linear(zc, prep["k_w"], prep["k_b"], prep["v_w"], prep["v_b"])

    # Flash attention on (B, S, C) layout; head split/merge lives in the BlockSpecs.
    # attn_dropout is identity in eval mode.
    y = pallas_flash_attention(q.reshape(B, T, C), k.reshape(B, N, C),
                               v.reshape(B, N, C), n_head)

    # Output projection; resid_dropout is identity in eval mode.
    y = pallas_linear(y.reshape(B * T, C), prep["proj_w"], prep["proj_b"])
    return y.reshape(B, T, C).astype(x.dtype)


# Pure-JAX reference mirroring the PyTorch forward, for correctness check.
def reference(params, x, z, n_head):
    B, T, C = x.shape
    _, N, _ = z.shape
    hd = C // n_head
    q = x @ params["q_attn_w"] + params["q_attn_b"]
    k = z @ params["k_attn_w"] + params["k_attn_b"]
    v = z @ params["v_attn_w"] + params["v_attn_b"]
    q = q.reshape(B, T, n_head, hd).transpose(0, 2, 1, 3)
    k = k.reshape(B, N, n_head, hd).transpose(0, 2, 1, 3)
    v = v.reshape(B, N, n_head, hd).transpose(0, 2, 1, 3)
    att = (q @ jnp.swapaxes(k, -2, -1)) * (1.0 / math.sqrt(hd))
    att = jax.nn.softmax(att, axis=-1)
    y = (att @ v).transpose(0, 2, 1, 3).reshape(B, T, C)
    return y @ params["c_proj_w"] + params["c_proj_b"]


if __name__ == "__main__":
    B, T, N, C, n_head = 2, 8, 8, 32, 4

    key = jax.random.PRNGKey(0)
    kp, kx, kz = jax.random.split(key, 3)
    params = init_params(kp, C)
    x = jax.random.normal(kx, (B, T, C), jnp.float32)
    z = jax.random.normal(kz, (B, N, C), jnp.float32)

    ref = reference(params, x, z, n_head)
    fwd = jax.jit(functools.partial(causal_cross_attention, n_head=n_head))

    # f32 compute path (exact softmax divide -> tight parity with the reference).
    prep_f32 = prepare_params(params, n_head, jnp.float32)
    out_f32 = jax.block_until_ready(fwd(prep_f32, x, z))
    assert out_f32.shape == (B, T, C)
    assert jnp.allclose(out_f32, ref, atol=2e-3, rtol=2e-3), (
        "f32 mismatch vs reference: max abs diff "
        f"{float(jnp.max(jnp.abs(out_f32 - ref)))}")

    # bf16 MXU path (bf16 matmul inputs, f32 accumulation + f32 softmax math).
    prep_bf16 = prepare_params(params, n_head, jnp.bfloat16)
    out_bf16 = jax.block_until_ready(fwd(prep_bf16, x, z))
    assert out_bf16.shape == (B, T, C)
    assert bool(jnp.all(jnp.isfinite(out_bf16)))
    assert jnp.allclose(out_bf16, ref, atol=8e-2, rtol=8e-2), (
        "bf16 mismatch vs reference: max abs diff "
        f"{float(jnp.max(jnp.abs(out_bf16 - ref)))}")

    print("KERNEL_OK")
</pallas_src>

<mosaic_0001>
module attributes {stable_mosaic.version = 11 : i64} {
  func.func @_kv_linear_kernel(%arg0: i32, %arg1: i32, %arg2: i32, %arg3: memref<16x32xf32, #tpu.memory_space<vmem>>, %arg4: memref<32x32xf32, #tpu.memory_space<vmem>>, %arg5: memref<32x32xf32, #tpu.memory_space<vmem>>, %arg6: memref<1x32xf32, #tpu.memory_space<vmem>>, %arg7: memref<1x32xf32, #tpu.memory_space<vmem>>, %arg8: memref<16x32xf32, #tpu.memory_space<vmem>>, %arg9: memref<16x32xf32, #tpu.memory_space<vmem>>, %arg10: memref<16x32xf32, #tpu.memory_space<vmem>>, %arg11: memref<16x32xf32, #tpu.memory_space<vmem>>) attributes {dimension_semantics = [#tpu.dimension_semantics<parallel>, #tpu.dimension_semantics<parallel>, #tpu.dimension_semantics<arbitrary>], iteration_bounds = array<i64: 1, 1, 1>, scalar_prefetch = 0 : i64, scratch_operands = 2 : i64, tpu.core_type = #tpu.core_type<tc>, window_params = [{transform_indices = @transform_0, window_bounds = array<i64: 16, 32>}, {transform_indices = @transform_1, window_bounds = array<i64: 32, 32>}, {transform_indices = @transform_2, window_bounds = array<i64: 32, 32>}, {transform_indices = @transform_3, window_bounds = array<i64: 1, 32>}, {transform_indices = @transform_4, window_bounds = array<i64: 1, 32>}, {transform_indices = @transform_5, window_bounds = array<i64: 16, 32>}, {transform_indices = @transform_6, window_bounds = array<i64: 16, 32>}]} {
    %c0_i32 = arith.constant 0 : i32
    %0 = arith.cmpi eq, %arg2, %c0_i32 : i32
    %1 = arith.extui %0 : i1 to i32
    %c0_i32_0 = arith.constant 0 : i32
    %2 = arith.cmpi ne, %1, %c0_i32_0 : i32
    scf.if %2 {
      %cst_17 = arith.constant 0.000000e+00 : f32
      %17 = vector.broadcast %cst_17 : f32 to vector<16x32xf32>
      %c0_18 = arith.constant 0 : index
      %c0_19 = arith.constant 0 : index
      %18 = vector.load %arg10[%c0_18, %c0_19] : memref<16x32xf32, #tpu.memory_space<vmem>>, vector<16x32xf32>
      tpu.vector_store %arg10[%c0_18, %c0_19], %17 {strides = array<i32>} : memref<16x32xf32, #tpu.memory_space<vmem>>, vector<16x32xf32>,
      %cst_20 = arith.constant 0.000000e+00 : f32
      %19 = vector.broadcast %cst_20 : f32 to vector<16x32xf32>
      %c0_21 = arith.constant 0 : index
      %c0_22 = arith.constant 0 : index
      %20 = vector.load %arg11[%c0_21, %c0_22] : memref<16x32xf32, #tpu.memory_space<vmem>>, vector<16x32xf32>
      tpu.vector_store %arg11[%c0_21, %c0_22], %19 {strides = array<i32>} : memref<16x32xf32, #tpu.memory_space<vmem>>, vector<16x32xf32>,
    } else {
    }
    %c0 = arith.constant 0 : index
    %c0_1 = arith.constant 0 : index
    %3 = vector.load %arg3[%c0, %c0_1] : memref<16x32xf32, #tpu.memory_space<vmem>>, vector<16x32xf32>
    %c0_2 = arith.constant 0 : index
    %c0_3 = arith.constant 0 : index
    %4 = vector.load %arg10[%c0_2, %c0_3] : memref<16x32xf32, #tpu.memory_space<vmem>>, vector<16x32xf32>
    %c0_4 = arith.constant 0 : index
    %c0_5 = arith.constant 0 : index
    %5 = vector.load %arg4[%c0_4, %c0_5] : memref<32x32xf32, #tpu.memory_space<vmem>>, vector<32x32xf32>
    %cst = arith.constant dense<0.000000e+00> : vector<16x32xf32>
    %6 = tpu.matmul %3, %5, %cst {dimension_numbers = #tpu.dot_dimension_numbers<[1], [0], [0], [1], [0, 0, 1, 1], [], []>} : vector<16x32xf32>, vector<32x32xf32>, vector<16x32xf32> -> vector<16x32xf32>
    %7 = arith.addf %4, %6 : vector<16x32xf32>
    %c0_6 = arith.constant 0 : index
    %c0_7 = arith.constant 0 : index
    %8 = vector.load %arg10[%c0_6, %c0_7] : memref<16x32xf32, #tpu.memory_space<vmem>>, vector<16x32xf32>
    tpu.vector_store %arg10[%c0_6, %c0_7], %7 {strides = array<i32>} : memref<16x32xf32, #tpu.memory_space<vmem>>, vector<16x32xf32>,
    %c0_8 = arith.constant 0 : index
    %c0_9 = arith.constant 0 : index
    %9 = vector.load %arg11[%c0_8, %c0_9] : memref<16x32xf32, #tpu.memory_space<vmem>>, vector<16x32xf32>
    %c0_10 = arith.constant 0 : index
    %c0_11 = arith.constant 0 : index
    %10 = vector.load %arg5[%c0_10, %c0_11] : memref<32x32xf32, #tpu.memory_space<vmem>>, vector<32x32xf32>
    %cst_12 = arith.constant dense<0.000000e+00> : vector<16x32xf32>
    %11 = tpu.matmul %3, %10, %cst_12 {dimension_numbers = #tpu.dot_dimension_numbers<[1], [0], [0], [1], [0, 0, 1, 1], [], []>} : vector<16x32xf32>, vector<32x32xf32>, vector<16x32xf32> -> vector<16x32xf32>
    %12 = arith.addf %9, %11 : vector<16x32xf32>
    %c0_13 = arith.constant 0 : index
    %c0_14 = arith.constant 0 : index
    %13 = vector.load %arg11[%c0_13, %c0_14] : memref<16x32xf32, #tpu.memory_space<vmem>>, vector<16x32xf32>
    tpu.vector_store %arg11[%c0_13, %c0_14], %12 {strides = array<i32>} : memref<16x32xf32, #tpu.memory_space<vmem>>, vector<16x32xf32>,
    %c0_i32_15 = arith.constant 0 : i32
    %14 = arith.cmpi eq, %arg2, %c0_i32_15 : i32
    %15 = arith.extui %14 : i1 to i32
    %c0_i32_16 = arith.constant 0 : i32
    %16 = arith.cmpi ne, %15, %c0_i32_16 : i32
    scf.if %16 {
      %c0_17 = arith.constant 0 : index
      %c0_18 = arith.constant 0 : index
      %17 = vector.load %arg10[%c0_17, %c0_18] : memref<16x32xf32, #tpu.memory_space<vmem>>, vector<16x32xf32>
      %c0_19 = arith.constant 0 : index
      %c0_20 = arith.constant 0 : index
      %18 = vector.load %arg6[%c0_19, %c0_20] : memref<1x32xf32, #tpu.memory_space<vmem>>, vector<1x32xf32>
      %19 = vector.broadcast %18 : vector<1x32xf32> to vector<16x32xf32>
      %20 = arith.addf %17, %19 : vector<16x32xf32>
      %c0_21 = arith.constant 0 : index
      %c0_22 = arith.constant 0 : index
      %21 = vector.load %arg8[%c0_21, %c0_22] : memref<16x32xf32, #tpu.memory_space<vmem>>, vector<16x32xf32>
      tpu.vector_store %arg8[%c0_21, %c0_22], %20 {strides = array<i32>} : memref<16x32xf32, #tpu.memory_space<vmem>>, vector<16x32xf32>,
      %c0_23 = arith.constant 0 : index
      %c0_24 = arith.constant 0 : index
      %22 = vector.load %arg11[%c0_23, %c0_24] : memref<16x32xf32, #tpu.memory_space<vmem>>, vector<16x32xf32>
      %c0_25 = arith.constant 0 : index
      %c0_26 = arith.constant 0 : index
      %23 = vector.load %arg7[%c0_25, %c0_26] : memref<1x32xf32, #tpu.memory_space<vmem>>, vector<1x32xf32>
      %24 = vector.broadcast %23 : vector<1x32xf32> to vector<16x32xf32>
      %25 = arith.addf %22, %24 : vector<16x32xf32>
      %c0_27 = arith.constant 0 : index
      %c0_28 = arith.constant 0 : index
      %26 = vector.load %arg9[%c0_27, %c0_28] : memref<16x32xf32, #tpu.memory_space<vmem>>, vector<16x32xf32>
      tpu.vector_store %arg9[%c0_27, %c0_28], %25 {strides = array<i32>} : memref<16x32xf32, #tpu.memory_space<vmem>>, vector<16x32xf32>,
    } else {
    }
    return
  }
  func.func @transform_0(%arg0: i32, %arg1: i32, %arg2: i32) -> (i32, i32) {
    %c0_i32 = arith.constant 0 : i32
    return %arg0, %arg2 : i32, i32
  }
  func.func @transform_1(%arg0: i32, %arg1: i32, %arg2: i32) -> (i32, i32) {
    %c0_i32 = arith.constant 0 : i32
    return %arg2, %arg1 : i32, i32
  }
  func.func @transform_2(%arg0: i32, %arg1: i32, %arg2: i32) -> (i32, i32) {
    %c0_i32 = arith.constant 0 : i32
    return %arg2, %arg1 : i32, i32
  }
  func.func @transform_3(%arg0: i32, %arg1: i32, %arg2: i32) -> (i32, i32) {
    %c0_i32 = arith.constant 0 : i32
    %c0_i32_0 = arith.constant 0 : i32
    return %c0_i32, %arg1 : i32, i32
  }
  func.func @transform_4(%arg0: i32, %arg1: i32, %arg2: i32) -> (i32, i32) {
    %c0_i32 = arith.constant 0 : i32
    %c0_i32_0 = arith.constant 0 : i32
    return %c0_i32, %arg1 : i32, i32
  }
  func.func @transform_5(%arg0: i32, %arg1: i32, %arg2: i32) -> (i32, i32) {
    %c0_i32 = arith.constant 0 : i32
    return %arg0, %arg1 : i32, i32
  }
  func.func @transform_6(%arg0: i32, %arg1: i32, %arg2: i32) -> (i32, i32) {
    %c0_i32 = arith.constant 0 : i32
    return %arg0, %arg1 : i32, i32
  }
}

module attributes {stable_mosaic.version = 11 : i64} {
  func.func @_flash_attn_kernel(%arg0: i32, %arg1: i32, %arg2: i32, %arg3: i32, %arg4: memref<1x8x32xf32, #tpu.memory_space<vmem>>, %arg5: memref<1x8x32xf32, #tpu.memory_space<vmem>>, %arg6: memref<1x8x32xf32, #tpu.memory_space<vmem>>, %arg7: memref<1x8x32xf32, #tpu.memory_space<vmem>>, %arg8: memref<4x8x1xf32, #tpu.memory_space<vmem>>, %arg9: memref<4x8x1xf32, #tpu.memory_space<vmem>>, %arg10: memref<4x8x8xf32, #tpu.memory_space<vmem>>) attributes {dimension_semantics = [#tpu.dimension_semantics<parallel>, #tpu.dimension_semantics<parallel>, #tpu.dimension_semantics<parallel>, #tpu.dimension_semantics<arbitrary>], iteration_bounds = array<i64: 2, 1, 1, 1>, scalar_prefetch = 0 : i64, scratch_operands = 3 : i64, tpu.core_type = #tpu.core_type<tc>, window_params = [{transform_indices = @transform_0, window_bounds = array<i64: 1, 8, 32>}, {transform_indices = @transform_1, window_bounds = array<i64: 1, 8, 32>}, {transform_indices = @transform_2, window_bounds = array<i64: 1, 8, 32>}, {transform_indices = @transform_3, window_bounds = array<i64: 1, 8, 32>}]} {
    %c0_i32 = arith.constant 0 : i32
    %0 = arith.cmpi eq, %arg3, %c0_i32 : i32
    %1 = arith.extui %0 : i1 to i32
    %c0_i32_0 = arith.constant 0 : i32
    %2 = arith.cmpi ne, %1, %c0_i32_0 : i32
    scf.if %2 {
      %cst_119 = arith.constant 0xFF800000 : f32
      %158 = vector.broadcast %cst_119 : f32 to vector<4x8x1xf32>
      %c0_120 = arith.constant 0 : index
      %c0_121 = arith.constant 0 : index
      %c0_122 = arith.constant 0 : index
      %159 = vector.load %arg8[%c0_120, %c0_121, %c0_122] : memref<4x8x1xf32, #tpu.memory_space<vmem>>, vector<4x8x1xf32>
      tpu.vector_store %arg8[%c0_120, %c0_121, %c0_122], %158 {strides = array<i32>} : memref<4x8x1xf32, #tpu.memory_space<vmem>>, vector<4x8x1xf32>,
      %cst_123 = arith.constant 0.000000e+00 : f32
      %160 = vector.broadcast %cst_123 : f32 to vector<4x8x1xf32>
      %c0_124 = arith.constant 0 : index
      %c0_125 = arith.constant 0 : index
      %c0_126 = arith.constant 0 : index
      %161 = vector.load %arg9[%c0_124, %c0_125, %c0_126] : memref<4x8x1xf32, #tpu.memory_space<vmem>>, vector<4x8x1xf32>
      tpu.vector_store %arg9[%c0_124, %c0_125, %c0_126], %160 {strides = array<i32>} : memref<4x8x1xf32, #tpu.memory_space<vmem>>, vector<4x8x1xf32>,
      %cst_127 = arith.constant 0.000000e+00 : f32
      %162 = vector.broadcast %cst_127 : f32 to vector<4x8x8xf32>
      %c0_128 = arith.constant 0 : index
      %c0_129 = arith.constant 0 : index
      %c0_130 = arith.constant 0 : index
      %163 = vector.load %arg10[%c0_128, %c0_129, %c0_130] : memref<4x8x8xf32, #tpu.memory_space<vmem>>, vector<4x8x8xf32>
      tpu.vector_store %arg10[%c0_128, %c0_129, %c0_130], %162 {strides = array<i32>} : memref<4x8x8xf32, #tpu.memory_space<vmem>>, vector<4x8x8xf32>,
    } else {
    }
    %c0 = arith.constant 0 : index
    %c0_1 = arith.constant 0 : index
    %c0_2 = arith.constant 0 : index
    %3 = vector.load %arg4[%c0, %c0_1, %c0_2] : memref<1x8x32xf32, #tpu.memory_space<vmem>>, vector<1x8x8xf32>
    %4 = vector.shape_cast %3 : vector<1x8x8xf32> to vector<8x8xf32>
    %c0_3 = arith.constant 0 : index
    %c0_4 = arith.constant 0 : index
    %c0_5 = arith.constant 0 : index
    %5 = vector.load %arg5[%c0_3, %c0_4, %c0_5] : memref<1x8x32xf32, #tpu.memory_space<vmem>>, vector<1x8x8xf32>
    %6 = vector.shape_cast %5 : vector<1x8x8xf32> to vector<8x8xf32>
    %c0_6 = arith.constant 0 : index
    %c0_7 = arith.constant 0 : index
    %c0_8 = arith.constant 0 : index
    %7 = vector.load %arg6[%c0_6, %c0_7, %c0_8] : memref<1x8x32xf32, #tpu.memory_space<vmem>>, vector<1x8x8xf32>
    %8 = vector.shape_cast %7 : vector<1x8x8xf32> to vector<8x8xf32>
    %cst = arith.constant dense<0.000000e+00> : vector<8x8xf32>
    %9 = tpu.matmul %4, %6, %cst {dimension_numbers = #tpu.dot_dimension_numbers<[1], [1], [0], [0], [0, 0, 1, 0], [], []>} : vector<8x8xf32>, vector<8x8xf32>, vector<8x8xf32> -> vector<8x8xf32>
    %c0_9 = arith.constant 0 : index
    %c0_10 = arith.constant 0 : index
    %c0_11 = arith.constant 0 : index
    %10 = vector.load %arg8[%c0_9, %c0_10, %c0_11] : memref<4x8x1xf32, #tpu.memory_space<vmem>>, vector<1x8x1xf32>
    %11 = vector.shape_cast %10 : vector<1x8x1xf32> to vector<8x1xf32>
    %cst_12 = arith.constant dense<0xFF800000> : vector<8xf32>
    %12 = vector.multi_reduction <maximumf>, %9, %cst_12 [1] : vector<8x8xf32> to vector<8xf32>
    %13 = vector.shape_cast %12 : vector<8xf32> to vector<8x1xf32>
    %14 = arith.maximumf %11, %13 : vector<8x1xf32>
    %15 = arith.subf %11, %14 : vector<8x1xf32>
    %16 = math.exp %15 : vector<8x1xf32>
    %17 = vector.broadcast %14 : vector<8x1xf32> to vector<8x8xf32>
    %18 = arith.subf %9, %17 : vector<8x8xf32>
    %19 = math.exp %18 : vector<8x8xf32>
    %c0_13 = arith.constant 0 : index
    %c0_14 = arith.constant 0 : index
    %c0_15 = arith.constant 0 : index
    %20 = vector.load %arg9[%c0_13, %c0_14, %c0_15] : memref<4x8x1xf32, #tpu.memory_space<vmem>>, vector<1x8x1xf32>
    %21 = vector.shape_cast %20 : vector<1x8x1xf32> to vector<8x1xf32>
    %22 = arith.mulf %16, %21 : vector<8x1xf32>
    %cst_16 = arith.constant dense<0.000000e+00> : vector<8xf32>
    %23 = vector.multi_reduction <add>, %19, %cst_16 [1] : vector<8x8xf32> to vector<8xf32>
    %24 = vector.shape_cast %23 : vector<8xf32> to vector<8x1xf32>
    %25 = arith.addf %22, %24 : vector<8x1xf32>
    %c0_17 = arith.constant 0 : index
    %c0_18 = arith.constant 0 : index
    %c0_19 = arith.constant 0 : index
    %26 = vector.load %arg9[%c0_17, %c0_18, %c0_19] : memref<4x8x1xf32, #tpu.memory_space<vmem>>, vector<1x8x1xf32>
    %27 = vector.shape_cast %26 : vector<1x8x1xf32> to vector<8x1xf32>
    %28 = vector.shape_cast %25 : vector<8x1xf32> to vector<1x8x1xf32>
    tpu.vector_store %arg9[%c0_17, %c0_18, %c0_19], %28 {strides = array<i32>} : memref<4x8x1xf32, #tpu.memory_space<vmem>>, vector<1x8x1xf32>,
    %cst_20 = arith.constant dense<0.000000e+00> : vector<8x8xf32>
    %29 = tpu.matmul %19, %8, %cst_20 {dimension_numbers = #tpu.dot_dimension_numbers<[1], [0], [0], [1], [0, 0, 1, 1], [], []>} : vector<8x8xf32>, vector<8x8xf32>, vector<8x8xf32> -> vector<8x8xf32>
    %c0_21 = arith.constant 0 : index
    %c0_22 = arith.constant 0 : index
    %c0_23 = arith.constant 0 : index
    %30 = vector.load %arg10[%c0_21, %c0_22, %c0_23] : memref<4x8x8xf32, #tpu.memory_space<vmem>>, vector<1x8x8xf32>
    %31 = vector.shape_cast %30 : vector<1x8x8xf32> to vector<8x8xf32>
    %32 = vector.broadcast %16 : vector<8x1xf32> to vector<8x8xf32>
    %33 = arith.mulf %32, %31 : vector<8x8xf32>
    %34 = arith.addf %33, %29 : vector<8x8xf32>
    %c0_24 = arith.constant 0 : index
    %c0_25 = arith.constant 0 : index
    %c0_26 = arith.constant 0 : index
    %35 = vector.load %arg10[%c0_24, %c0_25, %c0_26] : memref<4x8x8xf32, #tpu.memory_space<vmem>>, vector<1x8x8xf32>
    %36 = vector.shape_cast %35 : vector<1x8x8xf32> to vector<8x8xf32>
    %37 = vector.shape_cast %34 : vector<8x8xf32> to vector<1x8x8xf32>
    tpu.vector_store %arg10[%c0_24, %c0_25, %c0_26], %37 {strides = array<i32>} : memref<4x8x8xf32, #tpu.memory_space<vmem>>, vector<1x8x8xf32>,
    %c0_27 = arith.constant 0 : index
    %c0_28 = arith.constant 0 : index
    %c0_29 = arith.constant 0 : index
    %38 = vector.load %arg8[%c0_27, %c0_28, %c0_29] : memref<4x8x1xf32, #tpu.memory_space<vmem>>, vector<1x8x1xf32>
    %39 = vector.shape_cast %38 : vector<1x8x1xf32> to vector<8x1xf32>
    %40 = vector.shape_cast %14 : vector<8x1xf32> to vector<1x8x1xf32>
    tpu.vector_store %arg8[%c0_27, %c0_28, %c0_29], %40 {strides = array<i32>} : memref<4x8x1xf32, #tpu.memory_space<vmem>>, vector<1x8x1xf32>,
    %c0_30 = arith.constant 0 : index
    %c0_31 = arith.constant 0 : index
    %c8 = arith.constant 8 : index
    %41 = vector.load %arg4[%c0_30, %c0_31, %c8] : memref<1x8x32xf32, #tpu.memory_space<vmem>>, vector<1x8x8xf32>
    %42 = vector.shape_cast %41 : vector<1x8x8xf32> to vector<8x8xf32>
    %c0_32 = arith.constant 0 : index
    %c0_33 = arith.constant 0 : index
    %c8_34 = arith.constant 8 : index
    %43 = vector.load %arg5[%c0_32, %c0_33, %c8_34] : memref<1x8x32xf32, #tpu.memory_space<vmem>>, vector<1x8x8xf32>
    %44 = vector.shape_cast %43 : vector<1x8x8xf32> to vector<8x8xf32>
    %c0_35 = arith.constant 0 : index
    %c0_36 = arith.constant 0 : index
    %c8_37 = arith.constant 8 : index
    %45 = vector.load %arg6[%c0_35, %c0_36, %c8_37] : memref<1x8x32xf32, #tpu.memory_space<vmem>>, vector<1x8x8xf32>
    %46 = vector.shape_cast %45 : vector<1x8x8xf32> to vector<8x8xf32>
    %cst_38 = arith.constant dense<0.000000e+00> : vector<8x8xf32>
    %47 = tpu.matmul %42, %44, %cst_38 {dimension_numbers = #tpu.dot_dimension_numbers<[1], [1], [0], [0], [0, 0, 1, 0], [], []>} : vector<8x8xf32>, vector<8x8xf32>, vector<8x8xf32> -> vector<8x8xf32>
    %c1 = arith.constant 1 : index
    %c0_39 = arith.constant 0 : index
    %c0_40 = arith.constant 0 : index
    %48 = vector.load %arg8[%c1, %c0_39, %c0_40] : memref<4x8x1xf32, #tpu.memory_space<vmem>>, vector<1x8x1xf32>
    %49 = vector.shape_cast %48 : vector<1x8x1xf32> to vector<8x1xf32>
    %cst_41 = arith.constant dense<0xFF800000> : vector<8xf32>
    %50 = vector.multi_reduction <maximumf>, %47, %cst_41 [1] : vector<8x8xf32> to vector<8xf32>
    %51 = vector.shape_cast %50 : vector<8xf32> to vector<8x1xf32>
    %52 = arith.maximumf %49, %51 : vector<8x1xf32>
    %53 = arith.subf %49, %52 : vector<8x1xf32>
    %54 = math.exp %53 : vector<8x1xf32>
    %55 = vector.broadcast %52 : vector<8x1xf32> to vector<8x8xf32>
    %56 = arith.subf %47, %55 : vector<8x8xf32>
    %57 = math.exp %56 : vector<8x8xf32>
    %c1_42 = arith.constant 1 : index
    %c0_43 = arith.constant 0 : index
    %c0_44 = arith.constant 0 : index
    %58 = vector.load %arg9[%c1_42, %c0_43, %c0_44] : memref<4x8x1xf32, #tpu.memory_space<vmem>>, vector<1x8x1xf32>
    %59 = vector.shape_cast %58 : vector<1x8x1xf32> to vector<8x1xf32>
    %60 = arith.mulf %54, %59 : vector<8x1xf32>
    %cst_45 = arith.constant dense<0.000000e+00> : vector<8xf32>
    %61 = vector.multi_reduction <add>, %57, %cst_45 [1] : vector<8x8xf32> to vector<8xf32>
    %62 = vector.shape_cast %61 : vector<8xf32> to vector<8x1xf32>
    %63 = arith.addf %60, %62 : vector<8x1xf32>
    %c1_46 = arith.constant 1 : index
    %c0_47 = arith.constant 0 : index
    %c0_48 = arith.constant 0 : index
    %64 = vector.load %arg9[%c1_46, %c0_47, %c0_48] : memref<4x8x1xf32, #tpu.memory_space<vmem>>, vector<1x8x1xf32>
    %65 = vector.shape_cast %64 : vector<1x8x1xf32> to vector<8x1xf32>
    %66 = vector.shape_cast %63 : vector<8x1xf32> to vector<1x8x1xf32>
    tpu.vector_store %arg9[%c1_46, %c0_47, %c0_48], %66 {strides = array<i32>} : memref<4x8x1xf32, #tpu.memory_space<vmem>>, vector<1x8x1xf32>,
    %cst_49 = arith.constant dense<0.000000e+00> : vector<8x8xf32>
    %67 = tpu.matmul %57, %46, %cst_49 {dimension_numbers = #tpu.dot_dimension_numbers<[1], [0], [0], [1], [0, 0, 1, 1], [], []>} : vector<8x8xf32>, vector<8x8xf32>, vector<8x8xf32> -> vector<8x8xf32>
    %c1_50 = arith.constant 1 : index
    %c0_51 = arith.constant 0 : index
    %c0_52 = arith.constant 0 : index
    %68 = vector.load %arg10[%c1_50, %c0_51, %c0_52] : memref<4x8x8xf32, #tpu.memory_space<vmem>>, vector<1x8x8xf32>
    %69 = vector.shape_cast %68 : vector<1x8x8xf32> to vector<8x8xf32>
    %70 = vector.broadcast %54 : vector<8x1xf32> to vector<8x8xf32>
    %71 = arith.mulf %70, %69 : vector<8x8xf32>
    %72 = arith.addf %71, %67 : vector<8x8xf32>
    %c1_53 = arith.constant 1 : index
    %c0_54 = arith.constant 0 : index
    %c0_55 = arith.constant 0 : index
    %73 = vector.load %arg10[%c1_53, %c0_54, %c0_55] : memref<4x8x8xf32, #tpu.memory_space<vmem>>, vector<1x8x8xf32>
    %74 = vector.shape_cast %73 : vector<1x8x8xf32> to vector<8x8xf32>
    %75 = vector.shape_cast %72 : vector<8x8xf32> to vector<1x8x8xf32>
    tpu.vector_store %arg10[%c1_53, %c0_54, %c0_55], %75 {strides = array<i32>} : memref<4x8x8xf32, #tpu.memory_space<vmem>>, vector<1x8x8xf32>,
    %c1_56 = arith.constant 1 : index
    %c0_57 = arith.constant 0 : index
    %c0_58 = arith.constant 0 : index
    %76 = vector.load %arg8[%c1_56, %c0_57, %c0_58] : memref<4x8x1xf32, #tpu.memory_space<vmem>>, vector<1x8x1xf32>
    %77 = vector.shape_cast %76 : vector<1x8x1xf32> to vector<8x1xf32>
    %78 = vector.shape_cast %52 : vector<8x1xf32> to vector<1x8x1xf32>
    tpu.vector_store %arg8[%c1_56, %c0_57, %c0_58], %78 {strides = array<i32>} : memref<4x8x1xf32, #tpu.memory_space<vmem>>, vector<1x8x1xf32>,
    %c0_59 = arith.constant 0 : index
    %c0_60 = arith.constant 0 : index
    %c16 = arith.constant 16 : index
    %79 = vector.load %arg4[%c0_59, %c0_60, %c16] : memref<1x8x32xf32, #tpu.memory_space<vmem>>, vector<1x8x8xf32>
    %80 = vector.shape_cast %79 : vector<1x8x8xf32> to vector<8x8xf32>
    %c0_61 = arith.constant 0 : index
    %c0_62 = arith.constant 0 : index
    %c16_63 = arith.constant 16 : index
    %81 = vector.load %arg5[%c0_61, %c0_62, %c16_63] : memref<1x8x32xf32, #tpu.memory_space<vmem>>, vector<1x8x8xf32>
    %82 = vector.shape_cast %81 : vector<1x8x8xf32> to vector<8x8xf32>
    %c0_64 = arith.constant 0 : index
    %c0_65 = arith.constant 0 : index
    %c16_66 = arith.constant 16 : index
    %83 = vector.load %arg6[%c0_64, %c0_65, %c16_66] : memref<1x8x32xf32, #tpu.memory_space<vmem>>, vector<1x8x8xf32>
    %84 = vector.shape_cast %83 : vector<1x8x8xf32> to vector<8x8xf32>
    %cst_67 = arith.constant dense<0.000000e+00> : vector<8x8xf32>
    %85 = tpu.matmul %80, %82, %cst_67 {dimension_numbers = #tpu.dot_dimension_numbers<[1], [1], [0], [0], [0, 0, 1, 0], [], []>} : vector<8x8xf32>, vector<8x8xf32>, vector<8x8xf32> -> vector<8x8xf32>
    %c2 = arith.constant 2 : index
    %c0_68 = arith.constant 0 : index
    %c0_69 = arith.constant 0 : index
    %86 = vector.load %arg8[%c2, %c0_68, %c0_69] : memref<4x8x1xf32, #tpu.memory_space<vmem>>, vector<1x8x1xf32>
    %87 = vector.shape_cast %86 : vector<1x8x1xf32> to vector<8x1xf32>
    %cst_70 = arith.constant dense<0xFF800000> : vector<8xf32>
    %88 = vector.multi_reduction <maximumf>, %85, %cst_70 [1] : vector<8x8xf32> to vector<8xf32>
    %89 = vector.shape_cast %88 : vector<8xf32> to vector<8x1xf32>
    %90 = arith.maximumf %87, %89 : vector<8x1xf32>
    %91 = arith.subf %87, %90 : vector<8x1xf32>
    %92 = math.exp %91 : vector<8x1xf32>
    %93 = vector.broadcast %90 : vector<8x1xf32> to vector<8x8xf32>
    %94 = arith.subf %85, %93 : vector<8x8xf32>
    %95 = math.exp %94 : vector<8x8xf32>
    %c2_71 = arith.constant 2 : index
    %c0_72 = arith.constant 0 : index
    %c0_73 = arith.constant 0 : index
    %96 = vector.load %arg9[%c2_71, %c0_72, %c0_73] : memref<4x8x1xf32, #tpu.memory_space<vmem>>, vector<1x8x1xf32>
    %97 = vector.shape_cast %96 : vector<1x8x1xf32> to vector<8x1xf32>
    %98 = arith.mulf %92, %97 : vector<8x1xf32>
    %cst_74 = arith.constant dense<0.000000e+00> : vector<8xf32>
    %99 = vector.multi_reduction <add>, %95, %cst_74 [1] : vector<8x8xf32> to vector<8xf32>
    %100 = vector.shape_cast %99 : vector<8xf32> to vector<8x1xf32>
    %101 = arith.addf %98, %100 : vector<8x1xf32>
    %c2_75 = arith.constant 2 : index
    %c0_76 = arith.constant 0 : index
    %c0_77 = arith.constant 0 : index
    %102 = vector.load %arg9[%c2_75, %c0_76, %c0_77] : memref<4x8x1xf32, #tpu.memory_space<vmem>>, vector<1x8x1xf32>
    %103 = vector.shape_cast %102 : vector<1x8x1xf32> to vector<8x1xf32>
    %104 = vector.shape_cast %101 : vector<8x1xf32> to vector<1x8x1xf32>
    tpu.vector_store %arg9[%c2_75, %c0_76, %c0_77], %104 {strides = array<i32>} : memref<4x8x1xf32, #tpu.memory_space<vmem>>, vector<1x8x1xf32>,
    %cst_78 = arith.constant dense<0.000000e+00> : vector<8x8xf32>
    %105 = tpu.matmul %95, %84, %cst_78 {dimension_numbers = #tpu.dot_dimension_numbers<[1], [0], [0], [1], [0, 0, 1, 1], [], []>} : vector<8x8xf32>, vector<8x8xf32>, vector<8x8xf32> -> vector<8x8xf32>
    %c2_79 = arith.constant 2 : index
    %c0_80 = arith.constant 0 : index
    %c0_81 = arith.constant 0 : index
    %106 = vector.load %arg10[%c2_79, %c0_80, %c0_81] : memref<4x8x8xf32, #tpu.memory_space<vmem>>, vector<1x8x8xf32>
    %107 = vector.shape_cast %106 : vector<1x8x8xf32> to vector<8x8xf32>
    %108 = vector.broadcast %92 : vector<8x1xf32> to vector<8x8xf32>
    %109 = arith.mulf %108, %107 : vector<8x8xf32>
    %110 = arith.addf %109, %105 : vector<8x8xf32>
    %c2_82 = arith.constant 2 : index
    %c0_83 = arith.constant 0 : index
    %c0_84 = arith.constant 0 : index
    %111 = vector.load %arg10[%c2_82, %c0_83, %c0_84] : memref<4x8x8xf32, #tpu.memory_space<vmem>>, vector<1x8x8xf32>
    %112 = vector.shape_cast %111 : vector<1x8x8xf32> to vector<8x8xf32>
    %113 = vector.shape_cast %110 : vector<8x8xf32> to vector<1x8x8xf32>
    tpu.vector_store %arg10[%c2_82, %c0_83, %c0_84], %113 {strides = array<i32>} : memref<4x8x8xf32, #tpu.memory_space<vmem>>, vector<1x8x8xf32>,
    %c2_85 = arith.constant 2 : index
    %c0_86 = arith.constant 0 : index
    %c0_87 = arith.constant 0 : index
    %114 = vector.load %arg8[%c2_85, %c0_86, %c0_87] : memref<4x8x1xf32, #tpu.memory_space<vmem>>, vector<1x8x1xf32>
    %115 = vector.shape_cast %114 : vector<1x8x1xf32> to vector<8x1xf32>
    %116 = vector.shape_cast %90 : vector<8x1xf32> to vector<1x8x1xf32>
    tpu.vector_store %arg8[%c2_85, %c0_86, %c0_87], %116 {strides = array<i32>} : memref<4x8x1xf32, #tpu.memory_space<vmem>>, vector<1x8x1xf32>,
    %c0_88 = arith.constant 0 : index
    %c0_89 = arith.constant 0 : index
    %c24 = arith.constant 24 : index
    %117 = vector.load %arg4[%c0_88, %c0_89, %c24] : memref<1x8x32xf32, #tpu.memory_space<vmem>>, vector<1x8x8xf32>
    %118 = vector.shape_cast %117 : vector<1x8x8xf32> to vector<8x8xf32>
    %c0_90 = arith.constant 0 : index
    %c0_91 = arith.constant 0 : index
    %c24_92 = arith.constant 24 : index
    %119 = vector.load %arg5[%c0_90, %c0_91, %c24_92] : memref<1x8x32xf32, #tpu.memory_space<vmem>>, vector<1x8x8xf32>
    %120 = vector.shape_cast %119 : vector<1x8x8xf32> to vector<8x8xf32>
    %c0_93 = arith.constant 0 : index
    %c0_94 = arith.constant 0 : index
    %c24_95 = arith.constant 24 : index
    %121 = vector.load %arg6[%c0_93, %c0_94, %c24_95] : memref<1x8x32xf32, #tpu.memory_space<vmem>>, vector<1x8x8xf32>
    %122 = vector.shape_cast %121 : vector<1x8x8xf32> to vector<8x8xf32>
    %cst_96 = arith.constant dense<0.000000e+00> : vector<8x8xf32>
    %123 = tpu.matmul %118, %120, %cst_96 {dimension_numbers = #tpu.dot_dimension_numbers<[1], [1], [0], [0], [0, 0, 1, 0], [], []>} : vector<8x8xf32>, vector<8x8xf32>, vector<8x8xf32> -> vector<8x8xf32>
    %c3 = arith.constant 3 : index
    %c0_97 = arith.constant 0 : index
    %c0_98 = arith.constant 0 : index
    %124 = vector.load %arg8[%c3, %c0_97, %c0_98] : memref<4x8x1xf32, #tpu.memory_space<vmem>>, vector<1x8x1xf32>
    %125 = vector.shape_cast %124 : vector<1x8x1xf32> to vector<8x1xf32>
    %cst_99 = arith.constant dense<0xFF800000> : vector<8xf32>
    %126 = vector.multi_reduction <maximumf>, %123, %cst_99 [1] : vector<8x8xf32> to vector<8xf32>
    %127 = vector.shape_cast %126 : vector<8xf32> to vector<8x1xf32>
    %128 = arith.maximumf %125, %127 : vector<8x1xf32>
    %129 = arith.subf %125, %128 : vector<8x1xf32>
    %130 = math.exp %129 : vector<8x1xf32>
    %131 = vector.broadcast %128 : vector<8x1xf32> to vector<8x8xf32>
    %132 = arith.subf %123, %131 : vector<8x8xf32>
    %133 = math.exp %132 : vector<8x8xf32>
    %c3_100 = arith.constant 3 : index
    %c0_101 = arith.constant 0 : index
    %c0_102 = arith.constant 0 : index
    %134 = vector.load %arg9[%c3_100, %c0_101, %c0_102] : memref<4x8x1xf32, #tpu.memory_space<vmem>>, vector<1x8x1xf32>
    %135 = vector.shape_cast %134 : vector<1x8x1xf32> to vector<8x1xf32>
    %136 = arith.mulf %130, %135 : vector<8x1xf32>
    %cst_103 = arith.constant dense<0.000000e+00> : vector<8xf32>
    %137 = vector.multi_reduction <add>, %133, %cst_103 [1] : vector<8x8xf32> to vector<8xf32>
    %138 = vector.shape_cast %137 : vector<8xf32> to vector<8x1xf32>
    %139 = arith.addf %136, %138 : vector<8x1xf32>
    %c3_104 = arith.constant 3 : index
    %c0_105 = arith.constant 0 : index
    %c0_106 = arith.constant 0 : index
    %140 = vector.load %arg9[%c3_104, %c0_105, %c0_106] : memref<4x8x1xf32, #tpu.memory_space<vmem>>, vector<1x8x1xf32>
    %141 = vector.shape_cast %140 : vector<1x8x1xf32> to vector<8x1xf32>
    %142 = vector.shape_cast %139 : vector<8x1xf32> to vector<1x8x1xf32>
    tpu.vector_store %arg9[%c3_104, %c0_105, %c0_106], %142 {strides = array<i32>} : memref<4x8x1xf32, #tpu.memory_space<vmem>>, vector<1x8x1xf32>,
    %cst_107 = arith.constant dense<0.000000e+00> : vector<8x8xf32>
    %143 = tpu.matmul %133, %122, %cst_107 {dimension_numbers = #tpu.dot_dimension_numbers<[1], [0], [0], [1], [0, 0, 1, 1], [], []>} : vector<8x8xf32>, vector<8x8xf32>, vector<8x8xf32> -> vector<8x8xf32>
    %c3_108 = arith.constant 3 : index
    %c0_109 = arith.constant 0 : index
    %c0_110 = arith.constant 0 : index
    %144 = vector.load %arg10[%c3_108, %c0_109, %c0_110] : memref<4x8x8xf32, #tpu.memory_space<vmem>>, vector<1x8x8xf32>
    %145 = vector.shape_cast %144 : vector<1x8x8xf32> to vector<8x8xf32>
    %146 = vector.broadcast %130 : vector<8x1xf32> to vector<8x8xf32>
    %147 = arith.mulf %146, %145 : vector<8x8xf32>
    %148 = arith.addf %147, %143 : vector<8x8xf32>
    %c3_111 = arith.constant 3 : index
    %c0_112 = arith.constant 0 : index
    %c0_113 = arith.constant 0 : index
    %149 = vector.load %arg10[%c3_111, %c0_112, %c0_113] : memref<4x8x8xf32, #tpu.memory_space<vmem>>, vector<1x8x8xf32>
    %150 = vector.shape_cast %149 : vector<1x8x8xf32> to vector<8x8xf32>
    %151 = vector.shape_cast %148 : vector<8x8xf32> to vector<1x8x8xf32>
    tpu.vector_store %arg10[%c3_111, %c0_112, %c0_113], %151 {strides = array<i32>} : memref<4x8x8xf32, #tpu.memory_space<vmem>>, vector<1x8x8xf32>,
    %c3_114 = arith.constant 3 : index
    %c0_115 = arith.constant 0 : index
    %c0_116 = arith.constant 0 : index
    %152 = vector.load %arg8[%c3_114, %c0_115, %c0_116] : memref<4x8x1xf32, #tpu.memory_space<vmem>>, vector<1x8x1xf32>
    %153 = vector.shape_cast %152 : vector<1x8x1xf32> to vector<8x1xf32>
    %154 = vector.shape_cast %128 : vector<8x1xf32> to vector<1x8x1xf32>
    tpu.vector_store %arg8[%c3_114, %c0_115, %c0_116], %154 {strides = array<i32>} : memref<4x8x1xf32, #tpu.memory_space<vmem>>, vector<1x8x1xf32>,
    %c0_i32_117 = arith.constant 0 : i32
    %155 = arith.cmpi eq, %arg3, %c0_i32_117 : i32
    %156 = arith.extui %155 : i1 to i32
    %c0_i32_118 = arith.constant 0 : i32
    %157 = arith.cmpi ne, %156, %c0_i32_118 : i32
    scf.if %157 {
      %c0_119 = arith.constant 0 : index
      %c0_120 = arith.constant 0 : index
      %c0_121 = arith.constant 0 : index
      %158 = vector.load %arg10[%c0_119, %c0_120, %c0_121] : memref<4x8x8xf32, #tpu.memory_space<vmem>>, vector<1x8x8xf32>
      %159 = vector.shape_cast %158 : vector<1x8x8xf32> to vector<8x8xf32>
      %c0_122 = arith.constant 0 : index
      %c0_123 = arith.constant 0 : index
      %c0_124 = arith.constant 0 : index
      %160 = vector.load %arg9[%c0_122, %c0_123, %c0_124] : memref<4x8x1xf32, #tpu.memory_space<vmem>>, vector<1x8x1xf32>
      %161 = vector.shape_cast %160 : vector<1x8x1xf32> to vector<8x1xf32>
      %cst_125 = arith.constant 1.000000e+00 : f32
      %162 = vector.broadcast %cst_125 : f32 to vector<8x1xf32>
      %163 = arith.divf %162, %161 : vector<8x1xf32>
      %164 = vector.broadcast %163 : vector<8x1xf32> to vector<8x8xf32>
      %165 = arith.mulf %159, %164 : vector<8x8xf32>
      %c1_126 = arith.constant 1 : index
      %c0_127 = arith.constant 0 : index
      %c0_128 = arith.constant 0 : index
      %166 = vector.load %arg10[%c1_126, %c0_127, %c0_128] : memref<4x8x8xf32, #tpu.memory_space<vmem>>, vector<1x8x8xf32>
      %167 = vector.shape_cast %166 : vector<1x8x8xf32> to vector<8x8xf32>
      %c1_129 = arith.constant 1 : index
      %c0_130 = arith.constant 0 : index
      %c0_131 = arith.constant 0 : index
      %168 = vector.load %arg9[%c1_129, %c0_130, %c0_131] : memref<4x8x1xf32, #tpu.memory_space<vmem>>, vector<1x8x1xf32>
      %169 = vector.shape_cast %168 : vector<1x8x1xf32> to vector<8x1xf32>
      %cst_132 = arith.constant 1.000000e+00 : f32
      %170 = vector.broadcast %cst_132 : f32 to vector<8x1xf32>
      %171 = arith.divf %170, %169 : vector<8x1xf32>
      %172 = vector.broadcast %171 : vector<8x1xf32> to vector<8x8xf32>
      %173 = arith.mulf %167, %172 : vector<8x8xf32>
      %c2_133 = arith.constant 2 : index
      %c0_134 = arith.constant 0 : index
      %c0_135 = arith.constant 0 : index
      %174 = vector.load %arg10[%c2_133, %c0_134, %c0_135] : memref<4x8x8xf32, #tpu.memory_space<vmem>>, vector<1x8x8xf32>
      %175 = vector.shape_cast %174 : vector<1x8x8xf32> to vector<8x8xf32>
      %c2_136 = arith.constant 2 : index
      %c0_137 = arith.constant 0 : index
      %c0_138 = arith.constant 0 : index
      %176 = vector.load %arg9[%c2_136, %c0_137, %c0_138] : memref<4x8x1xf32, #tpu.memory_space<vmem>>, vector<1x8x1xf32>
      %177 = vector.shape_cast %176 : vector<1x8x1xf32> to vector<8x1xf32>
      %cst_139 = arith.constant 1.000000e+00 : f32
      %178 = vector.broadcast %cst_139 : f32 to vector<8x1xf32>
      %179 = arith.divf %178, %177 : vector<8x1xf32>
      %180 = vector.broadcast %179 : vector<8x1xf32> to vector<8x8xf32>
      %181 = arith.mulf %175, %180 : vector<8x8xf32>
      %c3_140 = arith.constant 3 : index
      %c0_141 = arith.constant 0 : index
      %c0_142 = arith.constant 0 : index
      %182 = vector.load %arg10[%c3_140, %c0_141, %c0_142] : memref<4x8x8xf32, #tpu.memory_space<vmem>>, vector<1x8x8xf32>
      %183 = vector.shape_cast %182 : vector<1x8x8xf32> to vector<8x8xf32>
      %c3_143 = arith.constant 3 : index
      %c0_144 = arith.constant 0 : index
      %c0_145 = arith.constant 0 : index
      %184 = vector.load %arg9[%c3_143, %c0_144, %c0_145] : memref<4x8x1xf32, #tpu.memory_space<vmem>>, vector<1x8x1xf32>
      %185 = vector.shape_cast %184 : vector<1x8x1xf32> to vector<8x1xf32>
      %cst_146 = arith.constant 1.000000e+00 : f32
      %186 = vector.broadcast %cst_146 : f32 to vector<8x1xf32>
      %187 = arith.divf %186, %185 : vector<8x1xf32>
      %188 = vector.broadcast %187 : vector<8x1xf32> to vector<8x8xf32>
      %189 = arith.mulf %183, %188 : vector<8x8xf32>
      %190 = tpu.concatenate %165, %173, %181, %189 in 1 : vector<8x8xf32>, vector<8x8xf32>, vector<8x8xf32>, vector<8x8xf32> -> vector<8x32xf32>
      %c0_147 = arith.constant 0 : index
      %c0_148 = arith.constant 0 : index
      %c0_149 = arith.constant 0 : index
      %191 = vector.load %arg7[%c0_147, %c0_148, %c0_149] : memref<1x8x32xf32, #tpu.memory_space<vmem>>, vector<1x8x32xf32>
      %192 = vector.shape_cast %191 : vector<1x8x32xf32> to vector<8x32xf32>
      %193 = vector.shape_cast %190 : vector<8x32xf32> to vector<1x8x32xf32>
      tpu.vector_store %arg7[%c0_147, %c0_148, %c0_149], %193 {strides = array<i32>} : memref<1x8x32xf32, #tpu.memory_space<vmem>>, vector<1x8x32xf32>,
    } else {
    }
    return
  }
  func.func @transform_0(%arg0: i32, %arg1: i32, %arg2: i32, %arg3: i32) -> (i32, i32, i32) {
    %c0_i32 = arith.constant 0 : i32
    return %arg0, %arg2, %arg1 : i32, i32, i32
  }
  func.func @transform_1(%arg0: i32, %arg1: i32, %arg2: i32, %arg3: i32) -> (i32, i32, i32) {
    %c0_i32 = arith.constant 0 : i32
    return %arg0, %arg3, %arg1 : i32, i32, i32
  }
  func.func @transform_2(%arg0: i32, %arg1: i32, %arg2: i32, %arg3: i32) -> (i32, i32, i32) {
    %c0_i32 = arith.constant 0 : i32
    return %arg0, %arg3, %arg1 : i32, i32, i32
  }
  func.func @transform_3(%arg0: i32, %arg1: i32, %arg2: i32, %arg3: i32) -> (i32, i32, i32) {
    %c0_i32 = arith.constant 0 : i32
    return %arg0, %arg2, %arg1 : i32, i32, i32
  }
}

module attributes {stable_mosaic.version = 11 : i64} {
  func.func @_linear_kernel(%arg0: i32, %arg1: i32, %arg2: i32, %arg3: memref<16x32xf32, #tpu.memory_space<vmem>>, %arg4: memref<32x32xf32, #tpu.memory_space<vmem>>, %arg5: memref<1x32xf32, #tpu.memory_space<vmem>>, %arg6: memref<16x32xf32, #tpu.memory_space<vmem>>, %arg7: memref<16x32xf32, #tpu.memory_space<vmem>>) attributes {dimension_semantics = [#tpu.dimension_semantics<parallel>, #tpu.dimension_semantics<parallel>, #tpu.dimension_semantics<arbitrary>], iteration_bounds = array<i64: 1, 1, 1>, scalar_prefetch = 0 : i64, scratch_operands = 1 : i64, tpu.core_type = #tpu.core_type<tc>, window_params = [{transform_indices = @transform_0, window_bounds = array<i64: 16, 32>}, {transform_indices = @transform_1, window_bounds = array<i64: 32, 32>}, {transform_indices = @transform_2, window_bounds = array<i64: 1, 32>}, {transform_indices = @transform_3, window_bounds = array<i64: 16, 32>}]} {
    %c0_i32 = arith.constant 0 : i32
    %0 = arith.cmpi eq, %arg2, %c0_i32 : i32
    %1 = arith.extui %0 : i1 to i32
    %c0_i32_0 = arith.constant 0 : i32
    %2 = arith.cmpi ne, %1, %c0_i32_0 : i32
    scf.if %2 {
      %cst_10 = arith.constant 0.000000e+00 : f32
      %12 = vector.broadcast %cst_10 : f32 to vector<16x32xf32>
      %c0_11 = arith.constant 0 : index
      %c0_12 = arith.constant 0 : index
      %13 = vector.load %arg7[%c0_11, %c0_12] : memref<16x32xf32, #tpu.memory_space<vmem>>, vector<16x32xf32>
      tpu.vector_store %arg7[%c0_11, %c0_12], %12 {strides = array<i32>} : memref<16x32xf32, #tpu.memory_space<vmem>>, vector<16x32xf32>,
    } else {
    }
    %c0 = arith.constant 0 : index
    %c0_1 = arith.constant 0 : index
    %3 = vector.load %arg7[%c0, %c0_1] : memref<16x32xf32, #tpu.memory_space<vmem>>, vector<16x32xf32>
    %c0_2 = arith.constant 0 : index
    %c0_3 = arith.constant 0 : index
    %4 = vector.load %arg3[%c0_2, %c0_3] : memref<16x32xf32, #tpu.memory_space<vmem>>, vector<16x32xf32>
    %c0_4 = arith.constant 0 : index
    %c0_5 = arith.constant 0 : index
    %5 = vector.load %arg4[%c0_4, %c0_5] : memref<32x32xf32, #tpu.memory_space<vmem>>, vector<32x32xf32>
    %cst = arith.constant dense<0.000000e+00> : vector<16x32xf32>
    %6 = tpu.matmul %4, %5, %cst {dimension_numbers = #tpu.dot_dimension_numbers<[1], [0], [0], [1], [0, 0, 1, 1], [], []>} : vector<16x32xf32>, vector<32x32xf32>, vector<16x32xf32> -> vector<16x32xf32>
    %7 = arith.addf %3, %6 : vector<16x32xf32>
    %c0_6 = arith.constant 0 : index
    %c0_7 = arith.constant 0 : index
    %8 = vector.load %arg7[%c0_6, %c0_7] : memref<16x32xf32, #tpu.memory_space<vmem>>, vector<16x32xf32>
    tpu.vector_store %arg7[%c0_6, %c0_7], %7 {strides = array<i32>} : memref<16x32xf32, #tpu.memory_space<vmem>>, vector<16x32xf32>,
    %c0_i32_8 = arith.constant 0 : i32
    %9 = arith.cmpi eq, %arg2, %c0_i32_8 : i32
    %10 = arith.extui %9 : i1 to i32
    %c0_i32_9 = arith.constant 0 : i32
    %11 = arith.cmpi ne, %10, %c0_i32_9 : i32
    scf.if %11 {
      %c0_10 = arith.constant 0 : index
      %c0_11 = arith.constant 0 : index
      %12 = vector.load %arg7[%c0_10, %c0_11] : memref<16x32xf32, #tpu.memory_space<vmem>>, vector<16x32xf32>
      %c0_12 = arith.constant 0 : index
      %c0_13 = arith.constant 0 : index
      %13 = vector.load %arg5[%c0_12, %c0_13] : memref<1x32xf32, #tpu.memory_space<vmem>>, vector<1x32xf32>
      %14 = vector.broadcast %13 : vector<1x32xf32> to vector<16x32xf32>
      %15 = arith.addf %12, %14 : vector<16x32xf32>
      %c0_14 = arith.constant 0 : index
      %c0_15 = arith.constant 0 : index
      %16 = vector.load %arg6[%c0_14, %c0_15] : memref<16x32xf32, #tpu.memory_space<vmem>>, vector<16x32xf32>
      tpu.vector_store %arg6[%c0_14, %c0_15], %15 {strides = array<i32>} : memref<16x32xf32, #tpu.memory_space<vmem>>, vector<16x32xf32>,
    } else {
    }
    return
  }
  func.func @transform_0(%arg0: i32, %arg1: i32, %arg2: i32) -> (i32, i32) {
    %c0_i32 = arith.constant 0 : i32
    return %arg0, %arg2 : i32, i32
  }
  func.func @transform_1(%arg0: i32, %arg1: i32, %arg2: i32) -> (i32, i32) {
    %c0_i32 = arith.constant 0 : i32
    return %arg2, %arg1 : i32, i32
  }
  func.func @transform_2(%arg0: i32, %arg1: i32, %arg2: i32) -> (i32, i32) {
    %c0_i32 = arith.constant 0 : i32
    %c0_i32_0 = arith.constant 0 : i32
    return %c0_i32, %arg1 : i32, i32
  }
  func.func @transform_3(%arg0: i32, %arg1: i32, %arg2: i32) -> (i32, i32) {
    %c0_i32 = arith.constant 0 : i32
    return %arg0, %arg1 : i32, i32
  }
}

module attributes {stable_mosaic.version = 11 : i64} {
  func.func @_linear_kernel(%arg0: i32, %arg1: i32, %arg2: i32, %arg3: memref<16x32xf32, #tpu.memory_space<vmem>>, %arg4: memref<32x32xf32, #tpu.memory_space<vmem>>, %arg5: memref<1x32xf32, #tpu.memory_space<vmem>>, %arg6: memref<16x32xf32, #tpu.memory_space<vmem>>, %arg7: memref<16x32xf32, #tpu.memory_space<vmem>>) attributes {dimension_semantics = [#tpu.dimension_semantics<parallel>, #tpu.dimension_semantics<parallel>, #tpu.dimension_semantics<arbitrary>], iteration_bounds = array<i64: 1, 1, 1>, scalar_prefetch = 0 : i64, scratch_operands = 1 : i64, tpu.core_type = #tpu.core_type<tc>, window_params = [{transform_indices = @transform_0, window_bounds = array<i64: 16, 32>}, {transform_indices = @transform_1, window_bounds = array<i64: 32, 32>}, {transform_indices = @transform_2, window_bounds = array<i64: 1, 32>}, {transform_indices = @transform_3, window_bounds = array<i64: 16, 32>}]} {
    %c0_i32 = arith.constant 0 : i32
    %0 = arith.cmpi eq, %arg2, %c0_i32 : i32
    %1 = arith.extui %0 : i1 to i32
    %c0_i32_0 = arith.constant 0 : i32
    %2 = arith.cmpi ne, %1, %c0_i32_0 : i32
    scf.if %2 {
      %cst_10 = arith.constant 0.000000e+00 : f32
      %12 = vector.broadcast %cst_10 : f32 to vector<16x32xf32>
      %c0_11 = arith.constant 0 : index
      %c0_12 = arith.constant 0 : index
      %13 = vector.load %arg7[%c0_11, %c0_12] : memref<16x32xf32, #tpu.memory_space<vmem>>, vector<16x32xf32>
      tpu.vector_store %arg7[%c0_11, %c0_12], %12 {strides = array<i32>} : memref<16x32xf32, #tpu.memory_space<vmem>>, vector<16x32xf32>,
    } else {
    }
    %c0 = arith.constant 0 : index
    %c0_1 = arith.constant 0 : index
    %3 = vector.load %arg7[%c0, %c0_1] : memref<16x32xf32, #tpu.memory_space<vmem>>, vector<16x32xf32>
    %c0_2 = arith.constant 0 : index
    %c0_3 = arith.constant 0 : index
    %4 = vector.load %arg3[%c0_2, %c0_3] : memref<16x32xf32, #tpu.memory_space<vmem>>, vector<16x32xf32>
    %c0_4 = arith.constant 0 : index
    %c0_5 = arith.constant 0 : index
    %5 = vector.load %arg4[%c0_4, %c0_5] : memref<32x32xf32, #tpu.memory_space<vmem>>, vector<32x32xf32>
    %cst = arith.constant dense<0.000000e+00> : vector<16x32xf32>
    %6 = tpu.matmul %4, %5, %cst {dimension_numbers = #tpu.dot_dimension_numbers<[1], [0], [0], [1], [0, 0, 1, 1], [], []>} : vector<16x32xf32>, vector<32x32xf32>, vector<16x32xf32> -> vector<16x32xf32>
    %7 = arith.addf %3, %6 : vector<16x32xf32>
    %c0_6 = arith.constant 0 : index
    %c0_7 = arith.constant 0 : index
    %8 = vector.load %arg7[%c0_6, %c0_7] : memref<16x32xf32, #tpu.memory_space<vmem>>, vector<16x32xf32>
    tpu.vector_store %arg7[%c0_6, %c0_7], %7 {strides = array<i32>} : memref<16x32xf32, #tpu.memory_space<vmem>>, vector<16x32xf32>,
    %c0_i32_8 = arith.constant 0 : i32
    %9 = arith.cmpi eq, %arg2, %c0_i32_8 : i32
    %10 = arith.extui %9 : i1 to i32
    %c0_i32_9 = arith.constant 0 : i32
    %11 = arith.cmpi ne, %10, %c0_i32_9 : i32
    scf.if %11 {
      %c0_10 = arith.constant 0 : index
      %c0_11 = arith.constant 0 : index
      %12 = vector.load %arg7[%c0_10, %c0_11] : memref<16x32xf32, #tpu.memory_space<vmem>>, vector<16x32xf32>
      %c0_12 = arith.constant 0 : index
      %c0_13 = arith.constant 0 : index
      %13 = vector.load %arg5[%c0_12, %c0_13] : memref<1x32xf32, #tpu.memory_space<vmem>>, vector<1x32xf32>
      %14 = vector.broadcast %13 : vector<1x32xf32> to vector<16x32xf32>
      %15 = arith.addf %12, %14 : vector<16x32xf32>
      %c0_14 = arith.constant 0 : index
      %c0_15 = arith.constant 0 : index
      %16 = vector.load %arg6[%c0_14, %c0_15] : memref<16x32xf32, #tpu.memory_space<vmem>>, vector<16x32xf32>
      tpu.vector_store %arg6[%c0_14, %c0_15], %15 {strides = array<i32>} : memref<16x32xf32, #tpu.memory_space<vmem>>, vector<16x32xf32>,
    } else {
    }
    return
  }
  func.func @transform_0(%arg0: i32, %arg1: i32, %arg2: i32) -> (i32, i32) {
    %c0_i32 = arith.constant 0 : i32
    return %arg0, %arg2 : i32, i32
  }
  func.func @transform_1(%arg0: i32, %arg1: i32, %arg2: i32) -> (i32, i32) {
    %c0_i32 = arith.constant 0 : i32
    return %arg2, %arg1 : i32, i32
  }
  func.func @transform_2(%arg0: i32, %arg1: i32, %arg2: i32) -> (i32, i32) {
    %c0_i32 = arith.constant 0 : i32
    %c0_i32_0 = arith.constant 0 : i32
    return %c0_i32, %arg1 : i32, i32
  }
  func.func @transform_3(%arg0: i32, %arg1: i32, %arg2: i32) -> (i32, i32) {
    %c0_i32 = arith.constant 0 : i32
    return %arg0, %arg1 : i32, i32
  }
}

</mosaic_0001>

<llo_original>
// kernel: causal_cross_attention.4
$region0: #{causal_cross_attention.4}
  #allocation0 [shape = 'u32[]', space=smem, size = 0x4, offset = 0x4, fixed_abs, tag = 'smem constant byte address 0x4 - core index']
  #allocation1 [shape = 'u32[72,128]{1,0:T(1,128)}', space=vmem, size = 0x9000, scoped, tag = 'internal scratch']
  #allocation2 [shape = 'f32[16,32]{1,0:T(8,128)}', space=vmem, size = 0x2000, scoped, tag = 'scratch operand']
  %s0 = inlined_call_operand.hbm [shape: f32[16,32], index: 0, kind: input, shape index: {}]
  %s1 = inlined_call_operand.hbm [shape: f32[32,32], index: 1, kind: input, shape index: {}]
  %s2 = inlined_call_operand.hbm [shape: f32[1,32], index: 2, kind: input, shape index: {}]
  %s3 = inlined_call_operand.vmem [shape: f32[16,32], index: 3, kind: output, shape index: {}]
  %s4 = sld [smem:[#allocation0]]
  $region42: #{causal_cross_attention.4} parent=0
    _
  %s6 = ssub.s32 1, %s4
  %s7 = scalar_select 0, %s6, %s4
  $region1: #{causal_cross_attention.4} parent=0
    #allocation3 [shape = 'u8[8192]{0}', space=vmem, size = 0x2000, scoped, tag = 'input window, operand 0, single buffered']
    #allocation4 [shape = 's32[1]{0}', space=sflag, size = 0x4, scoped, tag = 'scoped memory for causal_cross_attention.4']
    #allocation5 [shape = 'u8[16384]{0}', space=vmem, size = 0x4000, scoped, tag = 'input window, operand 1, single buffered']
    #allocation6 [shape = 's32[1]{0}', space=sflag, size = 0x4, scoped, tag = 'scoped memory for causal_cross_attention.4']
    #allocation7 [shape = 'u8[512]{0}', space=vmem, size = 0x400, scoped, tag = 'input window, operand 2, single buffered']
    %8 = vsyncpa [#allocation4], 0
    %9 = vsyncpa [#allocation6], 0
    // Predicated region
    $region2: #{causal_cross_attention.4} parent=1 // pred_check
      _
    $region3: #{causal_cross_attention.4} parent=1 // pred_check_branch
      %11 = sbr.rel (0) target = $region5
    $region4: #{causal_cross_attention.4} parent=1 // pred_region
      %13 = vsyncadd [#allocation4], 0
      %s14 = sshll.u32 %s0, 4
      %s15 = int_to_ptr.hbm [resolvable:$true] %s14
      %s16 = sshll.u32 [#allocation3], 4
      %s17 = int_to_ptr.vmem [resolvable:$true] %s16
      %22 = dma.hbm_to_vmem [thread:$0]  %s15, 256, %s17, [#allocation4], 128, 128, 8
    $region5: #{causal_cross_attention.4} parent=1 // pred_fallthru
      _
    // Predicated region
    $region6: #{causal_cross_attention.4} parent=1 // pred_check
      _
    $region7: #{causal_cross_attention.4} parent=1 // pred_check_branch
      %24 = sbr.rel (0) target = $region9
    $region8: #{causal_cross_attention.4} parent=1 // pred_region
      %26 = vsyncadd [#allocation6], 0
      %s27 = sshll.u32 %s1, 4
      %s28 = int_to_ptr.hbm [resolvable:$true] %s27
      %s29 = sshll.u32 [#allocation5], 4
      %s30 = int_to_ptr.vmem [resolvable:$true] %s29
      %35 = dma.hbm_to_vmem [thread:$0]  %s28, 512, %s30, [#allocation6], 128, 128, 8
    $region9: #{causal_cross_attention.4} parent=1 // pred_fallthru
      _
    // Predicated region
    $region10: #{causal_cross_attention.4} parent=1 // pred_check
      _
    $region11: #{causal_cross_attention.4} parent=1 // pred_check_branch
      %37 = sbr.rel (0) target = $region13
    $region12: #{causal_cross_attention.4} parent=1 // pred_region
      %39 = vsyncadd [#allocation6], 0
      %s41 = sshll.u32 %s2, 4
      %s42 = int_to_ptr.hbm [resolvable:$true] %s41
      %s43 = sshll.u32 [#allocation7], 4
      %s44 = int_to_ptr.vmem [resolvable:$true] %s43
      %46 = dma.hbm_to_vmem [thread:$0]  %s42, 16, %s44, [#allocation6]
    $region13: #{causal_cross_attention.4} parent=1 // pred_fallthru
      _
    // Predicated region
    $region14: #{causal_cross_attention.4} parent=1 // pred_check
      _
    $region15: #{causal_cross_attention.4} parent=1 // pred_check_branch
      %48 = sbr.rel (0) target = $region17
    $region16: #{causal_cross_attention.4} parent=1 // pred_region
      %50 = dma.done [#allocation4], 256
    $region17: #{causal_cross_attention.4} parent=1 // pred_fallthru
      _
    // Predicated region
    $region18: #{causal_cross_attention.4} parent=1 // pred_check
      _
    $region19: #{causal_cross_attention.4} parent=1 // pred_check_branch
      %52 = sbr.rel (0) target = $region21
    $region20: #{causal_cross_attention.4} parent=1 // pred_region
      %54 = dma.done [#allocation6], 512
    $region21: #{causal_cross_attention.4} parent=1 // pred_fallthru
      _
    // Predicated region
    $region22: #{causal_cross_attention.4} parent=1 // pred_check
      _
    $region23: #{causal_cross_attention.4} parent=1 // pred_check_branch
      %56 = sbr.rel (0) target = $region25
    $region24: #{causal_cross_attention.4} parent=1 // pred_region
      %58 = dma.done [#allocation6], 16
    $region25: #{causal_cross_attention.4} parent=1 // pred_fallthru
      _
    %p59 = scmp.eq.s32.totalorder 0, 0
    // Predicated region
    $region26: #{causal_cross_attention.4} parent=1 // pred_check
      %p60 = pneg %p59
    $region27: #{causal_cross_attention.4} parent=1 // pred_check_branch
      %62 = sbr.rel (%p60) target = $region29
    $region28: #{causal_cross_attention.4} parent=1 // pred_region
      %vm63 = vcmask 261120
      %64 = vst.msk [vmem:[#allocation2] sm:$0xff] %vm63, 0.0
      %65 = vst.msk [vmem:[#allocation2 + $0x8] sm:$0xff] %vm63, 0.0
    $region29: #{causal_cross_attention.4} parent=1 // pred_fallthru
      _
    %v66 = vld [vmem:[#allocation2] sm:$0xff]
    %v67 = vld [vmem:[#allocation2 + $0x8] sm:$0xff]
    %v68 = vld [vmem:[#allocation3] sm:$0xff]
    %v69 = vld [vmem:[#allocation3 + $0x8] sm:$0xff]
    %v70 = vld [vmem:[#allocation5] sm:$0xff]
    %v71 = vld [vmem:[#allocation5 + $0x8] sm:$0xff]
    %v72 = vld [vmem:[#allocation5 + $0x10] sm:$0xff]
    %v73 = vld [vmem:[#allocation5 + $0x18] sm:$0xff]
    %vm74 = vcmask 261120
    %v76 = vsel %vm74, %v68, 0
    %v79 = vsel %vm74, %v69, 0
    %81 = vmatpush.msra.mxu0 0.0
    %82 = vmatpush.msra.mxu0 0.0
    %83 = vmatpush.msra.mxu0 0.0
    %84 = vmatpush.msra.mxu0 0.0
    %85 = vmatpush.msra.mxu0 0.0
    %86 = vmatpush.msra.mxu0 0.0
    %87 = vmatpush.msra.mxu0 0.0
    %88 = vmatpush.msra.mxu0 0.0
    %89 = vmatpush.msra.mxu0 0.0
    %90 = vmatpush.msra.mxu0 0.0
    %91 = vmatpush.msra.mxu0 0.0
    %92 = vmatpush.msra.mxu0 0.0
    %93 = vmatpush.msra.mxu0 %v73
    %94 = vmatpush.msra.mxu0 %v72
    %95 = vmatpush.msra.mxu0 %v71
    %96 = vmatpush.msra.mxu0 %v70
    %97 = vmatmul.f32.gmra.mxu0 %v76
    %v98 = vpop.f32.mrf.mxu0
    %v99 = vadd.f32 0.0, %v98
    %100 = vmatmul.f32.gmra.mxu0 %v79
    %v101 = vpop.f32.mrf.mxu0
    %v102 = vadd.f32 0.0, %v101
    %103 = vdwg.mxu0
    %v104 = vadd.f32 %v66, %v99
    %v105 = vadd.f32 %v67, %v102
    %106 = vst.msk [vmem:[#allocation2] sm:$0xff] %vm74, %v104
    %107 = vst.msk [vmem:[#allocation2 + $0x8] sm:$0xff] %vm74, %v105
    // Predicated region
    $region30: #{causal_cross_attention.4} parent=1 // pred_check
      %p108 = pneg %p59
    $region31: #{causal_cross_attention.4} parent=1 // pred_check_branch
      %110 = sbr.rel (%p108) target = $region33
    $region32: #{causal_cross_attention.4} parent=1 // pred_region
      %v111 = vld [vmem:[#allocation2] sm:$0xff]
      %v112 = vld [vmem:[#allocation2 + $0x8] sm:$0xff]
      %v113 = vld [vmem:[#allocation7] sm:$0x1]
      %v115 = vperm.slane %v113, 0
      %v117 = vadd.f32 %v111, %v115
      %v118 = vadd.f32 %v112, %v115
      %119 = vst.msk [vmem:[%s3] sm:$0xff] %vm74, %v117
      %120 = vst.msk [vmem:[%s3 + $0x8] sm:$0xff] %vm74, %v118
    $region33: #{causal_cross_attention.4} parent=1 // pred_fallthru
      _
    // Predicated region
    $region34: #{causal_cross_attention.4} parent=1 // pred_check
      _
    $region35: #{causal_cross_attention.4} parent=1 // pred_check_branch
      %122 = sbr.rel (0) target = $region37
    $region36: #{causal_cross_attention.4} parent=1 // pred_region
      _
    $region37: #{causal_cross_attention.4} parent=1 // pred_fallthru
      _
    // Predicated region
    $region38: #{causal_cross_attention.4} parent=1 // pred_check
      _
    $region39: #{causal_cross_attention.4} parent=1 // pred_check_branch
      %124 = sbr.rel (0) target = $region41
    $region40: #{causal_cross_attention.4} parent=1 // pred_region
      _
    $region41: #{causal_cross_attention.4} parent=1 // pred_fallthru
      _
    %125 = vsyncpa [#allocation4], 1
    %126 = vsyncpa [#allocation6], 1

// kernel: causal_cross_attention.5
$region0: #{causal_cross_attention.5}
  #allocation0 [shape = 'u32[]', space=smem, size = 0x4, offset = 0x4, fixed_abs, tag = 'smem constant byte address 0x4 - core index']
  #allocation1 [shape = 'u32[72,128]{1,0:T(1,128)}', space=vmem, size = 0x9000, scoped, tag = 'internal scratch']
  #allocation2 [shape = 'f32[16,32]{1,0:T(8,128)}', space=vmem, size = 0x2000, scoped, tag = 'scratch operand']
  #allocation3 [shape = 'f32[16,32]{1,0:T(8,128)}', space=vmem, size = 0x2000, scoped, tag = 'scratch operand']
  %s0 = inlined_call_operand.vmem [shape: f32[16,32], index: 0, kind: input, shape index: {}]
  %s1 = inlined_call_operand.hbm [shape: f32[32,32], index: 1, kind: input, shape index: {}]
  %s2 = inlined_call_operand.hbm [shape: f32[32,32], index: 2, kind: input, shape index: {}]
  %s3 = inlined_call_operand.hbm [shape: f32[1,32], index: 3, kind: input, shape index: {}]
  %s4 = inlined_call_operand.hbm [shape: f32[1,32], index: 4, kind: input, shape index: {}]
  %s5 = inlined_call_operand.vmem [shape: f32[16,32], index: 5, kind: output, shape index: {0}]
  %s6 = inlined_call_operand.vmem [shape: f32[16,32], index: 6, kind: output, shape index: {1}]
  %7 = xla_tuple %s5, %s6
  %s8 = sld [smem:[#allocation0]]
  $region62: #{causal_cross_attention.5} parent=0
    _
  %s10 = ssub.s32 1, %s8
  %s11 = scalar_select 0, %s10, %s8
  $region1: #{causal_cross_attention.5} parent=0
    #allocation4 [shape = 'u8[16384]{0}', space=vmem, size = 0x4000, scoped, tag = 'input window, operand 1, single buffered']
    #allocation5 [shape = 's32[1]{0}', space=sflag, size = 0x4, scoped, tag = 'scoped memory for causal_cross_attention.5']
    #allocation6 [shape = 'u8[16384]{0}', space=vmem, size = 0x4000, scoped, tag = 'input window, operand 2, single buffered']
    #allocation7 [shape = 's32[1]{0}', space=sflag, size = 0x4, scoped, tag = 'scoped memory for causal_cross_attention.5']
    #allocation8 [shape = 'u8[512]{0}', space=vmem, size = 0x400, scoped, tag = 'input window, operand 3, single buffered']
    #allocation9 [shape = 'u8[512]{0}', space=vmem, size = 0x400, scoped, tag = 'input window, operand 4, single buffered']
    #allocation10 [shape = 's32[1]{0}', space=sflag, size = 0x4, scoped, tag = 'scoped memory for causal_cross_attention.5']
    %12 = vsyncpa [#allocation5], 0
    %13 = vsyncpa [#allocation7], 0
    %14 = vsyncpa [#allocation10], 0
    // Predicated region
    $region2: #{causal_cross_attention.5} parent=1 // pred_check
      _
    $region3: #{causal_cross_attention.5} parent=1 // pred_check_branch
      %16 = sbr.rel (0) target = $region5
    $region4: #{causal_cross_attention.5} parent=1 // pred_region
      _
    $region5: #{causal_cross_attention.5} parent=1 // pred_fallthru
      _
    // Predicated region
    $region6: #{causal_cross_attention.5} parent=1 // pred_check
      _
    $region7: #{causal_cross_attention.5} parent=1 // pred_check_branch
      %18 = sbr.rel (0) target = $region9
    $region8: #{causal_cross_attention.5} parent=1 // pred_region
      %20 = vsyncadd [#allocation5], 0
      %s21 = sshll.u32 %s1, 4
      %s22 = int_to_ptr.hbm [resolvable:$true] %s21
      %s23 = sshll.u32 [#allocation4], 4
      %s24 = int_to_ptr.vmem [resolvable:$true] %s23
      %29 = dma.hbm_to_vmem [thread:$0]  %s22, 512, %s24, [#allocation5], 128, 128, 8
    $region9: #{causal_cross_attention.5} parent=1 // pred_fallthru
      _
    // Predicated region
    $region10: #{causal_cross_attention.5} parent=1 // pred_check
      _
    $region11: #{causal_cross_attention.5} parent=1 // pred_check_branch
      %31 = sbr.rel (0) target = $region13
    $region12: #{causal_cross_attention.5} parent=1 // pred_region
      %33 = vsyncadd [#allocation7], 0
      %s34 = sshll.u32 %s2, 4
      %s35 = int_to_ptr.hbm [resolvable:$true] %s34
      %s36 = sshll.u32 [#allocation6], 4
      %s37 = int_to_ptr.vmem [resolvable:$true] %s36
      %42 = dma.hbm_to_vmem [thread:$0]  %s35, 512, %s37, [#allocation7], 128, 128, 8
    $region13: #{causal_cross_attention.5} parent=1 // pred_fallthru
      _
    // Predicated region
    $region14: #{causal_cross_attention.5} parent=1 // pred_check
      _
    $region15: #{causal_cross_attention.5} parent=1 // pred_check_branch
      %44 = sbr.rel (0) target = $region17
    $region16: #{causal_cross_attention.5} parent=1 // pred_region
      %46 = vsyncadd [#allocation7], 0
      %s48 = sshll.u32 %s3, 4
      %s49 = int_to_ptr.hbm [resolvable:$true] %s48
      %s50 = sshll.u32 [#allocation8], 4
      %s51 = int_to_ptr.vmem [resolvable:$true] %s50
      %53 = dma.hbm_to_vmem [thread:$0]  %s49, 16, %s51, [#allocation7]
    $region17: #{causal_cross_attention.5} parent=1 // pred_fallthru
      _
    // Predicated region
    $region18: #{causal_cross_attention.5} parent=1 // pred_check
      _
    $region19: #{causal_cross_attention.5} parent=1 // pred_check_branch
      %55 = sbr.rel (0) target = $region21
    $region20: #{causal_cross_attention.5} parent=1 // pred_region
      %57 = vsyncadd [#allocation10], 0
      %s59 = sshll.u32 %s4, 4
      %s60 = int_to_ptr.hbm [resolvable:$true] %s59
      %s61 = sshll.u32 [#allocation9], 4
      %s62 = int_to_ptr.vmem [resolvable:$true] %s61
      %64 = dma.hbm_to_vmem [thread:$0]  %s60, 16, %s62, [#allocation10]
    $region21: #{causal_cross_attention.5} parent=1 // pred_fallthru
      _
    // Predicated region
    $region22: #{causal_cross_attention.5} parent=1 // pred_check
      _
    $region23: #{causal_cross_attention.5} parent=1 // pred_check_branch
      %66 = sbr.rel (0) target = $region25
    $region24: #{causal_cross_attention.5} parent=1 // pred_region
      %68 = dma.done [#allocation5], 512
    $region25: #{causal_cross_attention.5} parent=1 // pred_fallthru
      _
    // Predicated region
    $region26: #{causal_cross_attention.5} parent=1 // pred_check
      _
    $region27: #{causal_cross_attention.5} parent=1 // pred_check_branch
      %70 = sbr.rel (0) target = $region29
    $region28: #{causal_cross_attention.5} parent=1 // pred_region
      %72 = dma.done [#allocation7], 512
    $region29: #{causal_cross_attention.5} parent=1 // pred_fallthru
      _
    // Predicated region
    $region30: #{causal_cross_attention.5} parent=1 // pred_check
      _
    $region31: #{causal_cross_attention.5} parent=1 // pred_check_branch
      %74 = sbr.rel (0) target = $region33
    $region32: #{causal_cross_attention.5} parent=1 // pred_region
      %76 = dma.done [#allocation7], 16
    $region33: #{causal_cross_attention.5} parent=1 // pred_fallthru
      _
    // Predicated region
    $region34: #{causal_cross_attention.5} parent=1 // pred_check
      _
    $region35: #{causal_cross_attention.5} parent=1 // pred_check_branch
      %78 = sbr.rel (0) target = $region37
    $region36: #{causal_cross_attention.5} parent=1 // pred_region
      %80 = dma.done [#allocation10], 16
    $region37: #{causal_cross_attention.5} parent=1 // pred_fallthru
      _
    %p81 = scmp.eq.s32.totalorder 0, 0
    // Predicated region
    $region38: #{causal_cross_attention.5} parent=1 // pred_check
      %p82 = pneg %p81
    $region39: #{causal_cross_attention.5} parent=1 // pred_check_branch
      %84 = sbr.rel (%p82) target = $region41
    $region40: #{causal_cross_attention.5} parent=1 // pred_region
      %vm85 = vcmask 261120
      %86 = vst.msk [vmem:[#allocation2] sm:$0xff] %vm85, 0.0
      %87 = vst.msk [vmem:[#allocation2 + $0x8] sm:$0xff] %vm85, 0.0
      %88 = vst.msk [vmem:[#allocation3] sm:$0xff] %vm85, 0.0
      %89 = vst.msk [vmem:[#allocation3 + $0x8] sm:$0xff] %vm85, 0.0
    $region41: #{causal_cross_attention.5} parent=1 // pred_fallthru
      _
    %v90 = vld [vmem:[%s0] sm:$0xff]
    %v91 = vld [vmem:[%s0 + $0x8] sm:$0xff]
    %v92 = vld [vmem:[#allocation2] sm:$0xff]
    %v93 = vld [vmem:[#allocation2 + $0x8] sm:$0xff]
    %v94 = vld [vmem:[#allocation4] sm:$0xff]
    %v95 = vld [vmem:[#allocation4 + $0x8] sm:$0xff]
    %v96 = vld [vmem:[#allocation4 + $0x10] sm:$0xff]
    %v97 = vld [vmem:[#allocation4 + $0x18] sm:$0xff]
    %vm98 = vcmask 261120
    %v100 = vsel %vm98, %v90, 0
    %v103 = vsel %vm98, %v91, 0
    %105 = vmatpush.msra.mxu0 0.0
    %106 = vmatpush.msra.mxu0 0.0
    %107 = vmatpush.msra.mxu0 0.0
    %108 = vmatpush.msra.mxu0 0.0
    %109 = vmatpush.msra.mxu0 0.0
    %110 = vmatpush.msra.mxu0 0.0
    %111 = vmatpush.msra.mxu0 0.0
    %112 = vmatpush.msra.mxu0 0.0
    %113 = vmatpush.msra.mxu0 0.0
    %114 = vmatpush.msra.mxu0 0.0
    %115 = vmatpush.msra.mxu0 0.0
    %116 = vmatpush.msra.mxu0 0.0
    %117 = vmatpush.msra.mxu0 %v97
    %118 = vmatpush.msra.mxu0 %v96
    %119 = vmatpush.msra.mxu0 %v95
    %120 = vmatpush.msra.mxu0 %v94
    %121 = vmatmul.f32.gmra.mxu0 %v100
    %v122 = vpop.f32.mrf.mxu0
    %v123 = vadd.f32 0.0, %v122
    %124 = vmatmul.f32.gmra.mxu0 %v103
    %v125 = vpop.f32.mrf.mxu0
    %v126 = vadd.f32 0.0, %v125
    %127 = vdwg.mxu0
    %v128 = vadd.f32 %v92, %v123
    %v129 = vadd.f32 %v93, %v126
    %130 = vst.msk [vmem:[#allocation2] sm:$0xff] %vm98, %v128
    %131 = vst.msk [vmem:[#allocation2 + $0x8] sm:$0xff] %vm98, %v129
    %v132 = vld [vmem:[#allocation3] sm:$0xff]
    %v133 = vld [vmem:[#allocation3 + $0x8] sm:$0xff]
    %v134 = vld [vmem:[#allocation6] sm:$0xff]
    %v135 = vld [vmem:[#allocation6 + $0x8] sm:$0xff]
    %v136 = vld [vmem:[#allocation6 + $0x10] sm:$0xff]
    %v137 = vld [vmem:[#allocation6 + $0x18] sm:$0xff]
    %138 = vmatpush.msra.mxu0 0.0
    %139 = vmatpush.msra.mxu0 0.0
    %140 = vmatpush.msra.mxu0 0.0
    %141 = vmatpush.msra.mxu0 0.0
    %142 = vmatpush.msra.mxu0 0.0
    %143 = vmatpush.msra.mxu0 0.0
    %144 = vmatpush.msra.mxu0 0.0
    %145 = vmatpush.msra.mxu0 0.0
    %146 = vmatpush.msra.mxu0 0.0
    %147 = vmatpush.msra.mxu0 0.0
    %148 = vmatpush.msra.mxu0 0.0
    %149 = vmatpush.msra.mxu0 0.0
    %150 = vmatpush.msra.mxu0 %v137
    %151 = vmatpush.msra.mxu0 %v136
    %152 = vmatpush.msra.mxu0 %v135
    %153 = vmatpush.msra.mxu0 %v134
    %154 = vmatmul.f32.gmra.mxu0 %v100
    %v155 = vpop.f32.mrf.mxu0
    %v156 = vadd.f32 0.0, %v155
    %157 = vmatmul.f32.gmra.mxu0 %v103
    %v158 = vpop.f32.mrf.mxu0
    %v159 = vadd.f32 0.0, %v158
    %160 = vdwg.mxu0
    %v161 = vadd.f32 %v132, %v156
    %v162 = vadd.f32 %v133, %v159
    %163 = vst.msk [vmem:[#allocation3] sm:$0xff] %vm98, %v161
    %164 = vst.msk [vmem:[#allocation3 + $0x8] sm:$0xff] %vm98, %v162
    // Predicated region
    $region42: #{causal_cross_attention.5} parent=1 // pred_check
      %p165 = pneg %p81
    $region43: #{causal_cross_attention.5} parent=1 // pred_check_branch
      %167 = sbr.rel (%p165) target = $region45
    $region44: #{causal_cross_attention.5} parent=1 // pred_region
      %v168 = vld [vmem:[#allocation2] sm:$0xff]
      %v169 = vld [vmem:[#allocation2 + $0x8] sm:$0xff]
      %v170 = vld [vmem:[#allocation8] sm:$0x1]
      %v172 = vperm.slane %v170, 0
      %v174 = vadd.f32 %v168, %v172
      %v175 = vadd.f32 %v169, %v172
      %176 = vst.msk [vmem:[%s5] sm:$0xff] %vm98, %v174
      %177 = vst.msk [vmem:[%s5 + $0x8] sm:$0xff] %vm98, %v175
      %v178 = vld [vmem:[#allocation3] sm:$0xff]
      %v179 = vld [vmem:[#allocation3 + $0x8] sm:$0xff]
      %v180 = vld [vmem:[#allocation9] sm:$0x1]
      %v182 = vperm.slane %v180, 0
      %v184 = vadd.f32 %v178, %v182
      %v185 = vadd.f32 %v179, %v182
      %186 = vst.msk [vmem:[%s6] sm:$0xff] %vm98, %v184
      %187 = vst.msk [vmem:[%s6 + $0x8] sm:$0xff] %vm98, %v185
    $region45: #{causal_cross_attention.5} parent=1 // pred_fallthru
      _
    // Predicated region
    $region46: #{causal_cross_attention.5} parent=1 // pred_check
      _
    $region47: #{causal_cross_attention.5} parent=1 // pred_check_branch
      %189 = sbr.rel (0) target = $region49
    $region48: #{causal_cross_attention.5} parent=1 // pred_region
      _
    $region49: #{causal_cross_attention.5} parent=1 // pred_fallthru
      _
    // Predicated region
    $region50: #{causal_cross_attention.5} parent=1 // pred_check
      _
    $region51: #{causal_cross_attention.5} parent=1 // pred_check_branch
      %191 = sbr.rel (0) target = $region53
    $region52: #{causal_cross_attention.5} parent=1 // pred_region
      _
    $region53: #{causal_cross_attention.5} parent=1 // pred_fallthru
      _
    // Predicated region
    $region54: #{causal_cross_attention.5} parent=1 // pred_check
      _
    $region55: #{causal_cross_attention.5} parent=1 // pred_check_branch
      %193 = sbr.rel (0) target = $region57
    $region56: #{causal_cross_attention.5} parent=1 // pred_region
      _
    $region57: #{causal_cross_attention.5} parent=1 // pred_fallthru
      _
    // Predicated region
    $region58: #{causal_cross_attention.5} parent=1 // pred_check
      _
    $region59: #{causal_cross_attention.5} parent=1 // pred_check_branch
      %195 = sbr.rel (0) target = $region61
    $region60: #{causal_cross_attention.5} parent=1 // pred_region
      _
    $region61: #{causal_cross_attention.5} parent=1 // pred_fallthru
      _
    %196 = vsyncpa [#allocation5], 1
    %197 = vsyncpa [#allocation7], 1
    %198 = vsyncpa [#allocation10], 1

// kernel: causal_cross_attention.7
$region0: #{causal_cross_attention.7}
  #allocation0 [shape = 'u32[]', space=smem, size = 0x4, offset = 0x4, fixed_abs, tag = 'smem constant byte address 0x4 - core index']
  #allocation1 [shape = 'u32[72,128]{1,0:T(1,128)}', space=vmem, size = 0x9000, scoped, tag = 'internal scratch']
  #allocation2 [shape = 'f32[16,32]{1,0:T(8,128)}', space=vmem, size = 0x2000, scoped, tag = 'scratch operand']
  %s0 = inlined_call_operand.vmem [shape: f32[16,32], index: 0, kind: input, shape index: {}]
  %s1 = inlined_call_operand.hbm [shape: f32[32,32], index: 1, kind: input, shape index: {}]
  %s2 = inlined_call_operand.vmem [shape: f32[1,32], index: 2, kind: input, shape index: {}]
  %s3 = inlined_call_operand.hbm [shape: f32[16,32], index: 3, kind: output, shape index: {}]
  %s4 = sld [smem:[#allocation0]]
  $region34: #{causal_cross_attention.7} parent=0
    _
  %s6 = ssub.s32 1, %s4
  %s7 = scalar_select 0, %s6, %s4
  $region1: #{causal_cross_attention.7} parent=0
    #allocation3 [shape = 'u8[16384]{0}', space=vmem, size = 0x4000, scoped, tag = 'input window, operand 1, single buffered']
    #allocation4 [shape = 's32[1]{0}', space=sflag, size = 0x4, scoped, tag = 'scoped memory for causal_cross_attention.7']
    #allocation5 [shape = 's32[1]{0}', space=sflag, size = 0x4, scoped, tag = 'scoped memory for causal_cross_attention.7']
    #allocation6 [shape = 'u8[8192]{0}', space=vmem, size = 0x2000, scoped, tag = 'output window, operand 0, single buffered']
    %8 = vsyncpa [#allocation4], 0
    %9 = vsyncpa [#allocation5], 0
    // Predicated region
    $region2: #{causal_cross_attention.7} parent=1 // pred_check
      _
    $region3: #{causal_cross_attention.7} parent=1 // pred_check_branch
      %11 = sbr.rel (0) target = $region5
    $region4: #{causal_cross_attention.7} parent=1 // pred_region
      _
    $region5: #{causal_cross_attention.7} parent=1 // pred_fallthru
      _
    // Predicated region
    $region6: #{causal_cross_attention.7} parent=1 // pred_check
      _
    $region7: #{causal_cross_attention.7} parent=1 // pred_check_branch
      %13 = sbr.rel (0) target = $region9
    $region8: #{causal_cross_attention.7} parent=1 // pred_region
      %15 = vsyncadd [#allocation4], 0
      %s16 = sshll.u32 %s1, 4
      %s17 = int_to_ptr.hbm [resolvable:$true] %s16
      %s18 = sshll.u32 [#allocation3], 4
      %s19 = int_to_ptr.vmem [resolvable:$true] %s18
      %24 = dma.hbm_to_vmem [thread:$0]  %s17, 512, %s19, [#allocation4], 128, 128, 8
    $region9: #{causal_cross_attention.7} parent=1 // pred_fallthru
      _
    // Predicated region
    $region10: #{causal_cross_attention.7} parent=1 // pred_check
      _
    $region11: #{causal_cross_attention.7} parent=1 // pred_check_branch
      %26 = sbr.rel (0) target = $region13
    $region12: #{causal_cross_attention.7} parent=1 // pred_region
      _
    $region13: #{causal_cross_attention.7} parent=1 // pred_fallthru
      _
    // Predicated region
    $region14: #{causal_cross_attention.7} parent=1 // pred_check
      _
    $region15: #{causal_cross_attention.7} parent=1 // pred_check_branch
      %28 = sbr.rel (0) target = $region17
    $region16: #{causal_cross_attention.7} parent=1 // pred_region
      %30 = dma.done [#allocation4], 512
    $region17: #{causal_cross_attention.7} parent=1 // pred_fallthru
      _
    %p31 = scmp.eq.s32.totalorder 0, 0
    // Predicated region
    $region18: #{causal_cross_attention.7} parent=1 // pred_check
      %p32 = pneg %p31
    $region19: #{causal_cross_attention.7} parent=1 // pred_check_branch
      %34 = sbr.rel (%p32) target = $region21
    $region20: #{causal_cross_attention.7} parent=1 // pred_region
      %vm35 = vcmask 261120
      %36 = vst.msk [vmem:[#allocation2] sm:$0xff] %vm35, 0.0
      %37 = vst.msk [vmem:[#allocation2 + $0x8] sm:$0xff] %vm35, 0.0
    $region21: #{causal_cross_attention.7} parent=1 // pred_fallthru
      _
    %v38 = vld [vmem:[#allocation2] sm:$0xff]
    %v39 = vld [vmem:[#allocation2 + $0x8] sm:$0xff]
    %v40 = vld [vmem:[%s0] sm:$0xff]
    %v41 = vld [vmem:[%s0 + $0x8] sm:$0xff]
    %v42 = vld [vmem:[#allocation3] sm:$0xff]
    %v43 = vld [vmem:[#allocation3 + $0x8] sm:$0xff]
    %v44 = vld [vmem:[#allocation3 + $0x10] sm:$0xff]
    %v45 = vld [vmem:[#allocation3 + $0x18] sm:$0xff]
    %vm46 = vcmask 261120
    %v48 = vsel %vm46, %v40, 0
    %v51 = vsel %vm46, %v41, 0
    %53 = vmatpush.msra.mxu0 0.0
    %54 = vmatpush.msra.mxu0 0.0
    %55 = vmatpush.msra.mxu0 0.0
    %56 = vmatpush.msra.mxu0 0.0
    %57 = vmatpush.msra.mxu0 0.0
    %58 = vmatpush.msra.mxu0 0.0
    %59 = vmatpush.msra.mxu0 0.0
    %60 = vmatpush.msra.mxu0 0.0
    %61 = vmatpush.msra.mxu0 0.0
    %62 = vmatpush.msra.mxu0 0.0
    %63 = vmatpush.msra.mxu0 0.0
    %64 = vmatpush.msra.mxu0 0.0
    %65 = vmatpush.msra.mxu0 %v45
    %66 = vmatpush.msra.mxu0 %v44
    %67 = vmatpush.msra.mxu0 %v43
    %68 = vmatpush.msra.mxu0 %v42
    %69 = vmatmul.f32.gmra.mxu0 %v48
    %v70 = vpop.f32.mrf.mxu0
    %v71 = vadd.f32 0.0, %v70
    %72 = vmatmul.f32.gmra.mxu0 %v51
    %v73 = vpop.f32.mrf.mxu0
    %v74 = vadd.f32 0.0, %v73
    %75 = vdwg.mxu0
    %v76 = vadd.f32 %v38, %v71
    %v77 = vadd.f32 %v39, %v74
    %78 = vst.msk [vmem:[#allocation2] sm:$0xff] %vm46, %v76
    %79 = vst.msk [vmem:[#allocation2 + $0x8] sm:$0xff] %vm46, %v77
    // Predicated region
    $region22: #{causal_cross_attention.7} parent=1 // pred_check
      %p80 = pneg %p31
    $region23: #{causal_cross_attention.7} parent=1 // pred_check_branch
      %82 = sbr.rel (%p80) target = $region25
    $region24: #{causal_cross_attention.7} parent=1 // pred_region
      %v83 = vld [vmem:[#allocation2] sm:$0xff]
      %v84 = vld [vmem:[#allocation2 + $0x8] sm:$0xff]
      %v85 = vld [vmem:[%s2] sm:$0x1]
      %v87 = vperm.slane %v85, 0
      %v89 = vadd.f32 %v83, %v87
      %v90 = vadd.f32 %v84, %v87
      %91 = vst.msk [vmem:[#allocation6] sm:$0xff] %vm46, %v89
      %92 = vst.msk [vmem:[#allocation6 + $0x8] sm:$0xff] %vm46, %v90
    $region25: #{causal_cross_attention.7} parent=1 // pred_fallthru
      _
    // Predicated region
    $region26: #{causal_cross_attention.7} parent=1 // pred_check
      _
    $region27: #{causal_cross_attention.7} parent=1 // pred_check_branch
      %94 = sbr.rel (0) target = $region29
    $region28: #{causal_cross_attention.7} parent=1 // pred_region
      %96 = vsyncadd [#allocation5], 0
      %s97 = sshll.u32 [#allocation6], 4
      %s98 = int_to_ptr.vmem [resolvable:$true] %s97
      %s99 = sshll.u32 %s3, 4
      %s100 = int_to_ptr.hbm [resolvable:$true] %s99
      %105 = dma.vmem_to_hbm [thread:$0]  %s98, 256, %s100, [#allocation5], 128, 128, 8
    $region29: #{causal_cross_attention.7} parent=1 // pred_fallthru
      _
    // Predicated region
    $region30: #{causal_cross_attention.7} parent=1 // pred_check
      _
    $region31: #{causal_cross_attention.7} parent=1 // pred_check_branch
      %107 = sbr.rel (0) target = $region33
    $region32: #{causal_cross_attention.7} parent=1 // pred_region
      %109 = dma.done [#allocation5], 256
    $region33: #{causal_cross_attention.7} parent=1 // pred_fallthru
      _
    %110 = vsyncpa [#allocation4], 1
    %111 = vsyncpa [#allocation5], 1

// kernel: causal_cross_attention.6
$region0: #{causal_cross_attention.6}
  #allocation0 [shape = 'u32[]', space=smem, size = 0x4, offset = 0x4, fixed_abs, tag = 'smem constant byte address 0x4 - core index']
  #allocation1 [shape = 'u32[72,128]{1,0:T(1,128)}', space=vmem, size = 0x9000, scoped, tag = 'internal scratch']
  #allocation2 [shape = 'f32[4,8,1]{2,1,0:T(8,128)}', space=vmem, size = 0x4000, scoped, tag = 'scratch operand']
  #allocation3 [shape = 'f32[4,8,1]{2,1,0:T(8,128)}', space=vmem, size = 0x4000, scoped, tag = 'scratch operand']
  #allocation4 [shape = 'f32[4,8,8]{2,1,0:T(8,128)}', space=vmem, size = 0x4000, scoped, tag = 'scratch operand']
  %s0 = inlined_call_operand.vmem [shape: f32[2,8,32], index: 0, kind: input, shape index: {}]
  %s1 = inlined_call_operand.vmem [shape: f32[2,8,32], index: 1, kind: input, shape index: {}]
  %s2 = inlined_call_operand.vmem [shape: f32[2,8,32], index: 2, kind: input, shape index: {}]
  %s3 = inlined_call_operand.vmem [shape: f32[2,8,32], index: 3, kind: output, shape index: {}]
  %s4 = sld [smem:[#allocation0]]
  $region53: #{causal_cross_attention.6} parent=0
    _
  %s6 = ssub.s32 1, %s4
  %s7 = scalar_select 0, %s6, %s4
  loop: start=0, step=1, limit=4
  $region2: #{causal_cross_attention.6} parent=0 // loop_pre_header
    _
  $region3: #{causal_cross_attention.6} parent=0 // loop_header
    %s9 = sphi 0, %s13
    %p10 = scmp.ge.s32.totalorder %s9, 4
    %s16 = sphi 0, %s42
    %s17 = sphi 0, %s38
    %s18 = sphi 0, %s34
    %s19 = sphi 0, %s30
    %s20 = sphi 0, %s16
    %s21 = sphi 0, %s17
    %s22 = sphi 0, %s18
    %s23 = sphi 0, %s19
    %s24 = sphi 0, %s20
    %s25 = sphi 0, %s21
    %s26 = sphi 0, %s22
    %s27 = sphi 0, %s23
    %s49 = sphi 0, %s51
    %s52 = sphi 0, %s49
    %s53 = sphi 0, %s52
    %s69 = sphi 0, %s53
    %s79 = sphi 0, %s81
    %s82 = sphi 0, %s79
    %s83 = sphi 0, %s82
    %s99 = sphi 0, %s83
    %s109 = sphi 0, %s111
    %s112 = sphi 0, %s109
    %s113 = sphi 0, %s112
    %s129 = sphi 0, %s113
    %s139 = sphi 0, %s141
    %s142 = sphi 0, %s139
    %s143 = sphi 0, %s142
    %s159 = sphi 0, %s143
  $region4: #{causal_cross_attention.6} parent=0 // loop_header_branch
    %12 = sbr.rel (%p10) target = $region8
  $region5: #{causal_cross_attention.6} parent=0 // loop_body
    %s14 = ssub.s32 %s9, 1
    %s15 = ssub.s32 %s9, 2
    %s28 = sadd.s32 1, %s19
    %p29 = scmp.ge.s32.totalorder %s28, 1
    %s30 = scalar_select %p29, 0, %s28
    %s31 = sadd.s32 1, %s18
    %s32 = scalar_select %p29, %s31, %s18
    %p33 = scmp.ge.s32.totalorder %s32, 1
    %s34 = scalar_select %p33, 0, %s32
    %s35 = sadd.s32 1, %s17
    %s36 = scalar_select %p33, %s35, %s17
    %p37 = scmp.ge.s32.totalorder %s36, 1
    %s38 = scalar_select %p37, 0, %s36
    %s39 = sadd.s32 1, %s16
    %s40 = scalar_select %p37, %s39, %s16
    %p41 = scmp.ge.s32.totalorder %s40, 2
    %s42 = scalar_select %p41, 0, %s40
    %s43 = ssub.s32 %s16, %s42
    %s44 = ssub.s32 %s18, %s34
    %s45 = sor.u32 %s43, %s44
    %s46 = ssub.s32 %s17, %s38
    %s47 = sor.u32 %s45, %s46
    %p48 = scmp.eq.s32.totalorder %s47, 0
    %s50 = sadd.s32 %s49, 1
    %s51 = scalar_select %p48, %s49, %s50
    %p54 = pneg %p48
    %p55 = scmp.eq.s32.totalorder %s9, 1
    %p56 = por %p54, %p55
    %p57 = scmp.ne.s32.totalorder %s49, %s52
    %p58 = scmp.eq.s32.totalorder %s9, 0
    %p59 = por %p57, %p58
    %p60 = scmp.ne.s32.totalorder %s49, %s52
    %p61 = scmp.eq.s32.totalorder %s14, 1
    %p62 = por %p60, %p61
    %p63 = scmp.ne.s32.totalorder %s52, %s53
    %p64 = scmp.eq.s32.totalorder %s14, 0
    %p65 = por %p63, %p64
    %p66 = scmp.ne.s32.totalorder %s52, %s53
    %p67 = scmp.eq.s32.totalorder %s15, 1
    %p68 = por %p66, %p67
    %p70 = scmp.ne.s32.totalorder %s53, %s69
    %p71 = scmp.eq.s32.totalorder %s15, 0
    %p72 = por %p70, %p71
    %s73 = ssub.s32 %s16, %s42
    %s74 = ssub.s32 %s19, %s30
    %s75 = sor.u32 %s73, %s74
    %s76 = ssub.s32 %s17, %s38
    %s77 = sor.u32 %s75, %s76
    %p78 = scmp.eq.s32.totalorder %s77, 0
    %s80 = sadd.s32 %s79, 1
    %s81 = scalar_select %p78, %s79, %s80
    %p84 = pneg %p78
    %p85 = scmp.eq.s32.totalorder %s9, 1
    %p86 = por %p84, %p85
    %p87 = scmp.ne.s32.totalorder %s79, %s82
    %p88 = scmp.eq.s32.totalorder %s9, 0
    %p89 = por %p87, %p88
    %p90 = scmp.ne.s32.totalorder %s79, %s82
    %p91 = scmp.eq.s32.totalorder %s14, 1
    %p92 = por %p90, %p91
    %p93 = scmp.ne.s32.totalorder %s82, %s83
    %p94 = scmp.eq.s32.totalorder %s14, 0
    %p95 = por %p93, %p94
    %p96 = scmp.ne.s32.totalorder %s82, %s83
    %p97 = scmp.eq.s32.totalorder %s15, 1
    %p98 = por %p96, %p97
    %p100 = scmp.ne.s32.totalorder %s83, %s99
    %p101 = scmp.eq.s32.totalorder %s15, 0
    %p102 = por %p100, %p101
    %s103 = ssub.s32 %s16, %s42
    %s104 = ssub.s32 %s19, %s30
    %s105 = sor.u32 %s103, %s104
    %s106 = ssub.s32 %s17, %s38
    %s107 = sor.u32 %s105, %s106
    %p108 = scmp.eq.s32.totalorder %s107, 0
    %s110 = sadd.s32 %s109, 1
    %s111 = scalar_select %p108, %s109, %s110
    %p114 = pneg %p108
    %p115 = scmp.eq.s32.totalorder %s9, 1
    %p116 = por %p114, %p115
    %p117 = scmp.ne.s32.totalorder %s109, %s112
    %p118 = scmp.eq.s32.totalorder %s9, 0
    %p119 = por %p117, %p118
    %p120 = scmp.ne.s32.totalorder %s109, %s112
    %p121 = scmp.eq.s32.totalorder %s14, 1
    %p122 = por %p120, %p121
    %p123 = scmp.ne.s32.totalorder %s112, %s113
    %p124 = scmp.eq.s32.totalorder %s14, 0
    %p125 = por %p123, %p124
    %p126 = scmp.ne.s32.totalorder %s112, %s113
    %p127 = scmp.eq.s32.totalorder %s15, 1
    %p128 = por %p126, %p127
    %p130 = scmp.ne.s32.totalorder %s113, %s129
    %p131 = scmp.eq.s32.totalorder %s15, 0
    %p132 = por %p130, %p131
    %s133 = ssub.s32 %s16, %s42
    %s134 = ssub.s32 %s18, %s34
    %s135 = sor.u32 %s133, %s134
    %s136 = ssub.s32 %s17, %s38
    %s137 = sor.u32 %s135, %s136
    %p138 = scmp.eq.s32.totalorder %s137, 0
    %s140 = sadd.s32 %s139, 1
    %s141 = scalar_select %p138, %s139, %s140
    %p144 = pneg %p138
    %p145 = scmp.eq.s32.totalorder %s9, 1
    %p146 = por %p144, %p145
    %p147 = scmp.ne.s32.totalorder %s139, %s142
    %p148 = scmp.eq.s32.totalorder %s9, 0
    %p149 = por %p147, %p148
    %p150 = scmp.ne.s32.totalorder %s139, %s142
    %p151 = scmp.eq.s32.totalorder %s14, 1
    %p152 = por %p150, %p151
    %p153 = scmp.ne.s32.totalorder %s142, %s143
    %p154 = scmp.eq.s32.totalorder %s14, 0
    %p155 = por %p153, %p154
    %p156 = scmp.ne.s32.totalorder %s142, %s143
    %p157 = scmp.eq.s32.totalorder %s15, 1
    %p158 = por %p156, %p157
    %p160 = scmp.ne.s32.totalorder %s143, %s159
    %p161 = scmp.eq.s32.totalorder %s15, 0
    %p162 = por %p160, %p161
    %p163 = scmp.le.s32.totalorder 1, %s9
    %p164 = scmp.lt.s32.totalorder %s9, 3
    %p165 = pnand %p163, %p164
    %p166 = pneg %p165
    // Predicated region
    $region9: #{causal_cross_attention.6} parent=5 // pred_check
      _
    $region10: #{causal_cross_attention.6} parent=5 // pred_check_branch
      %168 = sbr.rel (%p165) target = $region12
    $region11: #{causal_cross_attention.6} parent=5 // pred_region
      %s169 = ssub.s32 %s9, 1
    $region12: #{causal_cross_attention.6} parent=5 // pred_fallthru
      _
    %p170 = scmp.lt.s32.totalorder %s9, 2
    // Predicated region
    $region13: #{causal_cross_attention.6} parent=5 // pred_check
      %p171 = pneg %p170
    $region14: #{causal_cross_attention.6} parent=5 // pred_check_branch
      %173 = sbr.rel (%p171) target = $region16
    $region15: #{causal_cross_attention.6} parent=5 // pred_region
      // Predicated region
      $region17: #{causal_cross_attention.6} parent=15 // pred_check
        %p174 = pneg %p59
      $region18: #{causal_cross_attention.6} parent=15 // pred_check_branch
        %176 = sbr.rel (%p174) target = $region20
      $region19: #{causal_cross_attention.6} parent=15 // pred_region
        %p177 = scmp.lt.s32.totalorder %s16, 1
        %s178 = scalar_select %p177, %s16, 1
        %p179 = scmp.lt.s32.totalorder %s18, 0
        %s180 = scalar_select %p179, %s18, 0
        %p181 = scmp.lt.s32.totalorder %s17, 0
        %s182 = scalar_select %p181, %s17, 0
        %s183 = sadd.s32 %s182, %s180
        %s184 = sadd.s32 %s183, %s178
        %s185 = smul.addr %s184, 8
        %s186 = scalar_lea.vmem %s0, %s185
      $region20: #{causal_cross_attention.6} parent=15 // pred_fallthru
        _
      // Predicated region
      $region21: #{causal_cross_attention.6} parent=15 // pred_check
        %p187 = pneg %p89
      $region22: #{causal_cross_attention.6} parent=15 // pred_check_branch
        %189 = sbr.rel (%p187) target = $region24
      $region23: #{causal_cross_attention.6} parent=15 // pred_region
        %p190 = scmp.lt.s32.totalorder %s16, 1
        %s191 = scalar_select %p190, %s16, 1
        %p192 = scmp.lt.s32.totalorder %s19, 0
        %s193 = scalar_select %p192, %s19, 0
        %p194 = scmp.lt.s32.totalorder %s17, 0
        %s195 = scalar_select %p194, %s17, 0
        %s196 = sadd.s32 %s195, %s193
        %s197 = sadd.s32 %s196, %s191
        %s198 = smul.addr %s197, 8
        %s199 = scalar_lea.vmem %s1, %s198
      $region24: #{causal_cross_attention.6} parent=15 // pred_fallthru
        _
      // Predicated region
      $region25: #{causal_cross_attention.6} parent=15 // pred_check
        %p200 = pneg %p119
      $region26: #{causal_cross_attention.6} parent=15 // pred_check_branch
        %202 = sbr.rel (%p200) target = $region28
      $region27: #{causal_cross_attention.6} parent=15 // pred_region
        %p203 = scmp.lt.s32.totalorder %s16, 1
        %s204 = scalar_select %p203, %s16, 1
        %p205 = scmp.lt.s32.totalorder %s19, 0
        %s206 = scalar_select %p205, %s19, 0
        %p207 = scmp.lt.s32.totalorder %s17, 0
        %s208 = scalar_select %p207, %s17, 0
        %s209 = sadd.s32 %s208, %s206
        %s210 = sadd.s32 %s209, %s204
        %s211 = smul.addr %s210, 8
        %s212 = scalar_lea.vmem %s2, %s211
      $region28: #{causal_cross_attention.6} parent=15 // pred_fallthru
        _
    $region16: #{causal_cross_attention.6} parent=5 // pred_fallthru
      _
    %p213 = scmp.le.s32.totalorder 1, %s9
    %p214 = scmp.lt.s32.totalorder %s9, 3
    %p215 = pnand %p213, %p214
    %p216 = pneg %p215
    // Predicated region
    $region29: #{causal_cross_attention.6} parent=5 // pred_check
      _
    $region30: #{causal_cross_attention.6} parent=5 // pred_check_branch
      %218 = sbr.rel (%p215) target = $region32
    $region31: #{causal_cross_attention.6} parent=5 // pred_region
      %s219 = ssub.s32 %s9, 1
      %p220 = scmp.lt.s32.totalorder %s20, 1
      %s221 = scalar_select %p220, %s20, 1
      %p222 = scmp.lt.s32.totalorder %s22, 0
      %s223 = scalar_select %p222, %s22, 0
      %p224 = scmp.lt.s32.totalorder %s21, 0
      %s225 = scalar_select %p224, %s21, 0
      %s226 = sadd.s32 %s225, %s223
      %s227 = sadd.s32 %s226, %s221
      %s228 = smul.addr %s227, 8
      %s229 = scalar_lea.vmem %s0, %s228
      %p230 = pneg %p65
      %p231 = pneg %p62
      %p232 = scmp.lt.s32.totalorder %s20, 1
      %s233 = scalar_select %p232, %s20, 1
      %p234 = scmp.lt.s32.totalorder %s23, 0
      %s235 = scalar_select %p234, %s23, 0
      %p236 = scmp.lt.s32.totalorder %s21, 0
      %s237 = scalar_select %p236, %s21, 0
      %s238 = sadd.s32 %s237, %s235
      %s239 = sadd.s32 %s238, %s233
      %s240 = smul.addr %s239, 8
      %s241 = scalar_lea.vmem %s1, %s240
      %p242 = pneg %p95
      %p243 = pneg %p92
      %p244 = scmp.lt.s32.totalorder %s20, 1
      %s245 = scalar_select %p244, %s20, 1
      %p246 = scmp.lt.s32.totalorder %s23, 0
      %s247 = scalar_select %p246, %s23, 0
      %p248 = scmp.lt.s32.totalorder %s21, 0
      %s249 = scalar_select %p248, %s21, 0
      %s250 = sadd.s32 %s249, %s247
      %s251 = sadd.s32 %s250, %s245
      %s252 = smul.addr %s251, 8
      %s253 = scalar_lea.vmem %s2, %s252
      %p254 = pneg %p125
      %p255 = pneg %p122
      %p256 = pneg %p155
      %p257 = pneg %p152
      %p258 = scmp.lt.s32.totalorder %s20, 1
      %s259 = scalar_select %p258, %s20, 1
      %p260 = scmp.lt.s32.totalorder %s22, 0
      %s261 = scalar_select %p260, %s22, 0
      %p262 = scmp.lt.s32.totalorder %s21, 0
      %s263 = scalar_select %p262, %s21, 0
      %s264 = sadd.s32 %s263, %s261
      %s265 = sadd.s32 %s264, %s259
      %s266 = smul.addr %s265, 8
      %s267 = scalar_lea.vmem %s3, %s266
      %p268 = scmp.lt.s32.totalorder %s20, 1
      %s269 = scalar_select %p268, %s20, 1
      %p270 = scmp.lt.s32.totalorder %s22, 0
      %s271 = scalar_select %p270, %s22, 0
      %p272 = scmp.lt.s32.totalorder %s21, 0
      %s273 = scalar_select %p272, %s21, 0
      %s274 = sadd.s32 %s273, %s271
      %s275 = sadd.s32 %s274, %s269
      %s276 = smul.addr %s275, 8
      %s277 = scalar_lea.vmem %s0, %s276
      %p278 = scmp.lt.s32.totalorder %s20, 1
      %s279 = scalar_select %p278, %s20, 1
      %p280 = scmp.lt.s32.totalorder %s23, 0
      %s281 = scalar_select %p280, %s23, 0
      %p282 = scmp.lt.s32.totalorder %s21, 0
      %s283 = scalar_select %p282, %s21, 0
      %s284 = sadd.s32 %s283, %s281
      %s285 = sadd.s32 %s284, %s279
      %s286 = smul.addr %s285, 8
      %s287 = scalar_lea.vmem %s1, %s286
      %p288 = scmp.lt.s32.totalorder %s20, 1
      %s289 = scalar_select %p288, %s20, 1
      %p290 = scmp.lt.s32.totalorder %s23, 0
      %s291 = scalar_select %p290, %s23, 0
      %p292 = scmp.lt.s32.totalorder %s21, 0
      %s293 = scalar_select %p292, %s21, 0
      %s294 = sadd.s32 %s293, %s291
      %s295 = sadd.s32 %s294, %s289
      %s296 = smul.addr %s295, 8
      %s297 = scalar_lea.vmem %s2, %s296
      %p298 = scmp.lt.s32.totalorder %s20, 1
      %s299 = scalar_select %p298, %s20, 1
      %p300 = scmp.lt.s32.totalorder %s22, 0
      %s301 = scalar_select %p300, %s22, 0
      %p302 = scmp.lt.s32.totalorder %s21, 0
      %s303 = scalar_select %p302, %s21, 0
      %s304 = sadd.s32 %s303, %s301
      %s305 = sadd.s32 %s304, %s299
      %s306 = smul.addr %s305, 8
      %s307 = scalar_lea.vmem %s3, %s306
      %p308 = scmp.eq.s32.totalorder %s23, 0
      // Predicated region
      $region33: #{causal_cross_attention.6} parent=31 // pred_check
        %p309 = pneg %p308
      $region34: #{causal_cross_attention.6} parent=31 // pred_check_branch
        %311 = sbr.rel (%p309) target = $region36
      $region35: #{causal_cross_attention.6} parent=31 // pred_region
        %vm312 = vcmask 7168
        %313 = vst.msk [vmem:[#allocation2] sm:$0xff] %vm312, -inf
        %314 = vst.msk [vmem:[#allocation2 + $0x8] sm:$0xff] %vm312, -inf
        %315 = vst.msk [vmem:[#allocation2 + $0x10] sm:$0xff] %vm312, -inf
        %316 = vst.msk [vmem:[#allocation2 + $0x18] sm:$0xff] %vm312, -inf
        %317 = vst.msk [vmem:[#allocation3] sm:$0xff] %vm312, 0.0
        %318 = vst.msk [vmem:[#allocation3 + $0x8] sm:$0xff] %vm312, 0.0
        %319 = vst.msk [vmem:[#allocation3 + $0x10] sm:$0xff] %vm312, 0.0
        %320 = vst.msk [vmem:[#allocation3 + $0x18] sm:$0xff] %vm312, 0.0
        %vm321 = vcmask 64512
        %322 = vst.msk [vmem:[#allocation4] sm:$0xff] %vm321, 0.0
        %323 = vst.msk [vmem:[#allocation4 + $0x8] sm:$0xff] %vm321, 0.0
        %324 = vst.msk [vmem:[#allocation4 + $0x10] sm:$0xff] %vm321, 0.0
        %325 = vst.msk [vmem:[#allocation4 + $0x18] sm:$0xff] %vm321, 0.0
      $region36: #{causal_cross_attention.6} parent=31 // pred_fallthru
        _
      %v326 = vld [vmem:[%s277] sm:$0xff]
      %v327 = vld [vmem:[%s287] sm:$0xff]
      %v328 = vld [vmem:[%s297] sm:$0xff]
      %vm329 = vcmask 64512
      %v331 = vsel %vm329, %v326, 0
      %v334 = vsel %vm329, %v327, 0
      %336 = vmatpush.xpose.msra.mxu0 0.0
      %337 = vmatpush.xpose.msra.mxu0 0.0
      %338 = vmatpush.xpose.msra.mxu0 0.0
      %339 = vmatpush.xpose.msra.mxu0 0.0
      %340 = vmatpush.xpose.msra.mxu0 0.0
      %341 = vmatpush.xpose.msra.mxu0 0.0
      %342 = vmatpush.xpose.msra.mxu0 0.0
      %343 = vmatpush.xpose.msra.mxu0 0.0
      %344 = vmatpush.xpose.msra.mxu0 0.0
      %345 = vmatpush.xpose.msra.mxu0 0.0
      %346 = vmatpush.xpose.msra.mxu0 0.0
      %347 = vmatpush.xpose.msra.mxu0 0.0
      %348 = vmatpush.xpose.msra.mxu0 0.0
      %349 = vmatpush.xpose.msra.mxu0 0.0
      %350 = vmatpush.xpose.msra.mxu0 0.0
      %351 = vmatpush.xpose.msra.mxu0 %v334
      %352 = vmatmul.f32.gmra.mxu0 %v331
      %v353 = vpop.f32.mrf.mxu0
      %v354 = vadd.f32 0.0, %v353
      %355 = vdwg.mxu0
      %v356 = vld [vmem:[#allocation2] sm:$0xff]
      %v357 = vsel %vm329, %v354, -inf
      %358 = vmax.xlane.f32.xlu0 %v357
      %v359 = vpop.xlane.xlu0 %358
      %v360 = vmax.f32 %v356, %v359
      %v361 = vsub.f32 %v356, %v360
      %v362 = vmul.f32 %v361, 1.442695
      %v363 = vpow.pop %v362
      %365 = vset.pattern.permute.xlu0 0
      %366 = vperm.xlu0 %365, %v360
      %v367 = vpop.permute.xlu0 %366
      %v369 = vsub.f32 %v354, %v367
      %v370 = vmul.f32 %v369, 1.442695
      %v371 = vpow.pop %v370
      %v372 = vld [vmem:[#allocation3] sm:$0xff]
      %v373 = vmul.f32 %v363, %v372
      %v374 = vsel %vm329, %v371, 0.0
      %375 = vadd.xlane.f32.xlu0 %v374
      %v376 = vpop.xlane.xlu0 %375
      %v377 = vadd.f32 %v373, %v376
      %vm378 = vcmask 7168
      %379 = vst.msk [vmem:[#allocation3] sm:$0xff] %vm378, %v377
      %v381 = vsel %vm329, %v371, 0
      %383 = vmatpush.msra.mxu0 0.0
      %384 = vmatpush.msra.mxu0 0.0
      %385 = vmatpush.msra.mxu0 0.0
      %386 = vmatpush.msra.mxu0 0.0
      %387 = vmatpush.msra.mxu0 0.0
      %388 = vmatpush.msra.mxu0 0.0
      %389 = vmatpush.msra.mxu0 0.0
      %390 = vmatpush.msra.mxu0 0.0
      %391 = vmatpush.msra.mxu0 0.0
      %392 = vmatpush.msra.mxu0 0.0
      %393 = vmatpush.msra.mxu0 0.0
      %394 = vmatpush.msra.mxu0 0.0
      %395 = vmatpush.msra.mxu0 0.0
      %396 = vmatpush.msra.mxu0 0.0
      %397 = vmatpush.msra.mxu0 0.0
      %398 = vmatpush.msra.mxu0 %v328
      %399 = vmatmul.f32.gmra.mxu0 %v381
      %v400 = vpop.f32.mrf.mxu0
      %v401 = vadd.f32 0.0, %v400
      %402 = vdwg.mxu0
      %v403 = vld [vmem:[#allocation4] sm:$0xff]
      %405 = vset.pattern.permute.xlu0 0
      %406 = vperm.xlu0 %405, %v363
      %v407 = vpop.permute.xlu0 %406
      %v409 = vmul.f32 %v407, %v403
      %v410 = vadd.f32 %v409, %v401
      %411 = vst.msk [vmem:[#allocation4] sm:$0xff] %vm329, %v410
      %412 = vst.msk [vmem:[#allocation2] sm:$0xff] %vm378, %v360
      %v413 = vld [vmem:[%s277] sm:$0xff]
      %v414 = vld [vmem:[%s287] sm:$0xff]
      %v415 = vld [vmem:[%s297] sm:$0xff]
      %417 = vrot.lane.b32.xlu0 %v413, 120
      %v418 = vpop.permute.xlu0 %417
      %420 = vrot.lane.b32.xlu0 %v414, 120
      %v421 = vpop.permute.xlu0 %420
      %v422 = vsel %vm329, %v418, 0
      %v424 = vsel %vm329, %v421, 0
      %426 = vmatpush.xpose.msra.mxu0 0.0
      %427 = vmatpush.xpose.msra.mxu0 0.0
      %428 = vmatpush.xpose.msra.mxu0 0.0
      %429 = vmatpush.xpose.msra.mxu0 0.0
      %430 = vmatpush.xpose.msra.mxu0 0.0
      %431 = vmatpush.xpose.msra.mxu0 0.0
      %432 = vmatpush.xpose.msra.mxu0 0.0
      %433 = vmatpush.xpose.msra.mxu0 0.0
      %434 = vmatpush.xpose.msra.mxu0 0.0
      %435 = vmatpush.xpose.msra.mxu0 0.0
      %436 = vmatpush.xpose.msra.mxu0 0.0
      %437 = vmatpush.xpose.msra.mxu0 0.0
      %438 = vmatpush.xpose.msra.mxu0 0.0
      %439 = vmatpush.xpose.msra.mxu0 0.0
      %440 = vmatpush.xpose.msra.mxu0 0.0
      %441 = vmatpush.xpose.msra.mxu0 %v424
      %442 = vmatmul.f32.gmra.mxu0 %v422
      %v443 = vpop.f32.mrf.mxu0
      %v444 = vadd.f32 0.0, %v443
      %445 = vdwg.mxu0
      %s446 = scalar_lea.vmem [#allocation2], 8
      %v447 = vld [vmem:[%s446] sm:$0xff]
      %v448 = vsel %vm329, %v444, -inf
      %449 = vmax.xlane.f32.xlu0 %v448
      %v450 = vpop.xlane.xlu0 %449
      %v451 = vmax.f32 %v447, %v450
      %v452 = vsub.f32 %v447, %v451
      %v453 = vmul.f32 %v452, 1.442695
      %v454 = vpow.pop %v453
      %456 = vset.pattern.permute.xlu0 0
      %457 = vperm.xlu0 %456, %v451
      %v458 = vpop.permute.xlu0 %457
      %v460 = vsub.f32 %v444, %v458
      %v461 = vmul.f32 %v460, 1.442695
      %v462 = vpow.pop %v461
      %s463 = scalar_lea.vmem [#allocation3], 8
      %v464 = vld [vmem:[%s463] sm:$0xff]
      %v465 = vmul.f32 %v454, %v464
      %v466 = vsel %vm329, %v462, 0.0
      %467 = vadd.xlane.f32.xlu0 %v466
      %v468 = vpop.xlane.xlu0 %467
      %v469 = vadd.f32 %v465, %v468
      %470 = vst.msk [vmem:[%s463] sm:$0xff] %vm378, %v469
      %472 = vrot.lane.b32.xlu0 %v415, 120
      %v473 = vpop.permute.xlu0 %472
      %v476 = vsel %vm329, %v462, 0
      %478 = vmatpush.msra.mxu0 0.0
      %479 = vmatpush.msra.mxu0 0.0
      %480 = vmatpush.msra.mxu0 0.0
      %481 = vmatpush.msra.mxu0 0.0
      %482 = vmatpush.msra.mxu0 0.0
      %483 = vmatpush.msra.mxu0 0.0
      %484 = vmatpush.msra.mxu0 0.0
      %485 = vmatpush.msra.mxu0 0.0
      %486 = vmatpush.msra.mxu0 0.0
      %487 = vmatpush.msra.mxu0 0.0
      %488 = vmatpush.msra.mxu0 0.0
      %489 = vmatpush.msra.mxu0 0.0
      %490 = vmatpush.msra.mxu0 0.0
      %491 = vmatpush.msra.mxu0 0.0
      %492 = vmatpush.msra.mxu0 0.0
      %493 = vmatpush.msra.mxu0 %v473
      %494 = vmatmul.f32.gmra.mxu0 %v476
      %v495 = vpop.f32.mrf.mxu0
      %v496 = vadd.f32 0.0, %v495
      %497 = vdwg.mxu0
      %s498 = scalar_lea.vmem [#allocation4], 8
      %v499 = vld [vmem:[%s498] sm:$0xff]
      %501 = vset.pattern.permute.xlu0 0
      %502 = vperm.xlu0 %501, %v454
      %v503 = vpop.permute.xlu0 %502
      %v505 = vmul.f32 %v503, %v499
      %v506 = vadd.f32 %v505, %v496
      %507 = vst.msk [vmem:[%s498] sm:$0xff] %vm329, %v506
      %508 = vst.msk [vmem:[%s446] sm:$0xff] %vm378, %v451
      %v509 = vld [vmem:[%s277] sm:$0xff]
      %v510 = vld [vmem:[%s287] sm:$0xff]
      %v511 = vld [vmem:[%s297] sm:$0xff]
      %513 = vrot.lane.b32.xlu0 %v509, 112
      %v514 = vpop.permute.xlu0 %513
      %516 = vrot.lane.b32.xlu0 %v510, 112
      %v517 = vpop.permute.xlu0 %516
      %v518 = vsel %vm329, %v514, 0
      %v520 = vsel %vm329, %v517, 0
      %522 = vmatpush.xpose.msra.mxu0 0.0
      %523 = vmatpush.xpose.msra.mxu0 0.0
      %524 = vmatpush.xpose.msra.mxu0 0.0
      %525 = vmatpush.xpose.msra.mxu0 0.0
      %526 = vmatpush.xpose.msra.mxu0 0.0
      %527 = vmatpush.xpose.msra.mxu0 0.0
      %528 = vmatpush.xpose.msra.mxu0 0.0
      %529 = vmatpush.xpose.msra.mxu0 0.0
      %530 = vmatpush.xpose.msra.mxu0 0.0
      %531 = vmatpush.xpose.msra.mxu0 0.0
      %532 = vmatpush.xpose.msra.mxu0 0.0
      %533 = vmatpush.xpose.msra.mxu0 0.0
      %534 = vmatpush.xpose.msra.mxu0 0.0
      %535 = vmatpush.xpose.msra.mxu0 0.0
      %536 = vmatpush.xpose.msra.mxu0 0.0
      %537 = vmatpush.xpose.msra.mxu0 %v520
      %538 = vmatmul.f32.gmra.mxu0 %v518
      %v539 = vpop.f32.mrf.mxu0
      %v540 = vadd.f32 0.0, %v539
      %541 = vdwg.mxu0
      %s542 = scalar_lea.vmem [#allocation2], 16
      %v543 = vld [vmem:[%s542] sm:$0xff]
      %v544 = vsel %vm329, %v540, -inf
      %545 = vmax.xlane.f32.xlu0 %v544
      %v546 = vpop.xlane.xlu0 %545
      %v547 = vmax.f32 %v543, %v546
      %v548 = vsub.f32 %v543, %v547
      %v549 = vmul.f32 %v548, 1.442695
      %v550 = vpow.pop %v549
      %552 = vset.pattern.permute.xlu0 0
      %553 = vperm.xlu0 %552, %v547
      %v554 = vpop.permute.xlu0 %553
      %v556 = vsub.f32 %v540, %v554
      %v557 = vmul.f32 %v556, 1.442695
      %v558 = vpow.pop %v557
      %s559 = scalar_lea.vmem [#allocation3], 16
      %v560 = vld [vmem:[%s559] sm:$0xff]
      %v561 = vmul.f32 %v550, %v560
      %v562 = vsel %vm329, %v558, 0.0
      %563 = vadd.xlane.f32.xlu0 %v562
      %v564 = vpop.xlane.xlu0 %563
      %v565 = vadd.f32 %v561, %v564
      %566 = vst.msk [vmem:[%s559] sm:$0xff] %vm378, %v565
      %568 = vrot.lane.b32.xlu0 %v511, 112
      %v569 = vpop.permute.xlu0 %568
      %v572 = vsel %vm329, %v558, 0
      %574 = vmatpush.msra.mxu0 0.0
      %575 = vmatpush.msra.mxu0 0.0
      %576 = vmatpush.msra.mxu0 0.0
      %577 = vmatpush.msra.mxu0 0.0
      %578 = vmatpush.msra.mxu0 0.0
      %579 = vmatpush.msra.mxu0 0.0
      %580 = vmatpush.msra.mxu0 0.0
      %581 = vmatpush.msra.mxu0 0.0
      %582 = vmatpush.msra.mxu0 0.0
      %583 = vmatpush.msra.mxu0 0.0
      %584 = vmatpush.msra.mxu0 0.0
      %585 = vmatpush.msra.mxu0 0.0
      %586 = vmatpush.msra.mxu0 0.0
      %587 = vmatpush.msra.mxu0 0.0
      %588 = vmatpush.msra.mxu0 0.0
      %589 = vmatpush.msra.mxu0 %v569
      %590 = vmatmul.f32.gmra.mxu0 %v572
      %v591 = vpop.f32.mrf.mxu0
      %v592 = vadd.f32 0.0, %v591
      %593 = vdwg.mxu0
      %s594 = scalar_lea.vmem [#allocation4], 16
      %v595 = vld [vmem:[%s594] sm:$0xff]
      %597 = vset.pattern.permute.xlu0 0
      %598 = vperm.xlu0 %597, %v550
      %v599 = vpop.permute.xlu0 %598
      %v601 = vmul.f32 %v599, %v595
      %v602 = vadd.f32 %v601, %v592
      %603 = vst.msk [vmem:[%s594] sm:$0xff] %vm329, %v602
      %604 = vst.msk [vmem:[%s542] sm:$0xff] %vm378, %v547
      %v605 = vld [vmem:[%s277] sm:$0xff]
      %v606 = vld [vmem:[%s287] sm:$0xff]
      %v607 = vld [vmem:[%s297] sm:$0xff]
      %609 = vrot.lane.b32.xlu0 %v605, 104
      %v610 = vpop.permute.xlu0 %609
      %612 = vrot.lane.b32.xlu0 %v606, 104
      %v613 = vpop.permute.xlu0 %612
      %v614 = vsel %vm329, %v610, 0
      %v616 = vsel %vm329, %v613, 0
      %618 = vmatpush.xpose.msra.mxu0 0.0
      %619 = vmatpush.xpose.msra.mxu0 0.0
      %620 = vmatpush.xpose.msra.mxu0 0.0
      %621 = vmatpush.xpose.msra.mxu0 0.0
      %622 = vmatpush.xpose.msra.mxu0 0.0
      %623 = vmatpush.xpose.msra.mxu0 0.0
      %624 = vmatpush.xpose.msra.mxu0 0.0
      %625 = vmatpush.xpose.msra.mxu0 0.0
      %626 = vmatpush.xpose.msra.mxu0 0.0
      %627 = vmatpush.xpose.msra.mxu0 0.0
      %628 = vmatpush.xpose.msra.mxu0 0.0
      %629 = vmatpush.xpose.msra.mxu0 0.0
      %630 = vmatpush.xpose.msra.mxu0 0.0
      %631 = vmatpush.xpose.msra.mxu0 0.0
      %632 = vmatpush.xpose.msra.mxu0 0.0
      %633 = vmatpush.xpose.msra.mxu0 %v616
      %634 = vmatmul.f32.gmra.mxu0 %v614
      %v635 = vpop.f32.mrf.mxu0
      %v636 = vadd.f32 0.0, %v635
      %637 = vdwg.mxu0
      %s638 = scalar_lea.vmem [#allocation2], 24
      %v639 = vld [vmem:[%s638] sm:$0xff]
      %v640 = vsel %vm329, %v636, -inf
      %641 = vmax.xlane.f32.xlu0 %v640
      %v642 = vpop.xlane.xlu0 %641
      %v643 = vmax.f32 %v639, %v642
      %v644 = vsub.f32 %v639, %v643
      %v645 = vmul.f32 %v644, 1.442695
      %v646 = vpow.pop %v645
      %648 = vset.pattern.permute.xlu0 0
      %649 = vperm.xlu0 %648, %v643
      %v650 = vpop.permute.xlu0 %649
      %v652 = vsub.f32 %v636, %v650
      %v653 = vmul.f32 %v652, 1.442695
      %v654 = vpow.pop %v653
      %s655 = scalar_lea.vmem [#allocation3], 24
      %v656 = vld [vmem:[%s655] sm:$0xff]
      %v657 = vmul.f32 %v646, %v656
      %v658 = vsel %vm329, %v654, 0.0
      %659 = vadd.xlane.f32.xlu0 %v658
      %v660 = vpop.xlane.xlu0 %659
      %v661 = vadd.f32 %v657, %v660
      %662 = vst.msk [vmem:[%s655] sm:$0xff] %vm378, %v661
      %664 = vrot.lane.b32.xlu0 %v607, 104
      %v665 = vpop.permute.xlu0 %664
      %v668 = vsel %vm329, %v654, 0
      %670 = vmatpush.msra.mxu0 0.0
      %671 = vmatpush.msra.mxu0 0.0
      %672 = vmatpush.msra.mxu0 0.0
      %673 = vmatpush.msra.mxu0 0.0
      %674 = vmatpush.msra.mxu0 0.0
      %675 = vmatpush.msra.mxu0 0.0
      %676 = vmatpush.msra.mxu0 0.0
      %677 = vmatpush.msra.mxu0 0.0
      %678 = vmatpush.msra.mxu0 0.0
      %679 = vmatpush.msra.mxu0 0.0
      %680 = vmatpush.msra.mxu0 0.0
      %681 = vmatpush.msra.mxu0 0.0
      %682 = vmatpush.msra.mxu0 0.0
      %683 = vmatpush.msra.mxu0 0.0
      %684 = vmatpush.msra.mxu0 0.0
      %685 = vmatpush.msra.mxu0 %v665
      %686 = vmatmul.f32.gmra.mxu0 %v668
      %v687 = vpop.f32.mrf.mxu0
      %v688 = vadd.f32 0.0, %v687
      %689 = vdwg.mxu0
      %s690 = scalar_lea.vmem [#allocation4], 24
      %v691 = vld [vmem:[%s690] sm:$0xff]
      %693 = vset.pattern.permute.xlu0 0
      %694 = vperm.xlu0 %693, %v646
      %v695 = vpop.permute.xlu0 %694
      %v697 = vmul.f32 %v695, %v691
      %v698 = vadd.f32 %v697, %v688
      %699 = vst.msk [vmem:[%s690] sm:$0xff] %vm329, %v698
      %700 = vst.msk [vmem:[%s638] sm:$0xff] %vm378, %v643
      // Predicated region
      $region37: #{causal_cross_attention.6} parent=31 // pred_check
        %p701 = pneg %p308
      $region38: #{causal_cross_attention.6} parent=31 // pred_check_branch
        %703 = sbr.rel (%p701) target = $region40
      $region39: #{causal_cross_attention.6} parent=31 // pred_region
        %v704 = vld [vmem:[#allocation4] sm:$0xff]
        %v705 = vld [vmem:[#allocation3] sm:$0xff]
        %v706 = vrcp.pop %v705
        %v707 = vmul.f32 %v705, %v706
        %v708 = vsub.f32 1.0, %v707
        %v709 = vmul.f32 %v706, %v708
        %v710 = vadd.f32 %v706, %v709
        %vm711 = vweird.f32 %v705
        %vm712 = vweird.f32 %v706
        %vm713 = vmor %vm711, %vm712
        %v714 = vsel %vm713, %v706, %v710
        %v715 = vand.u32 2147483647, %v705
        %vm716 = vcmp.eq.f32.partialorder %v715, 8.507059e+37
        %v717 = vand.u32 %v705, 2147483648
        %v718 = vor.u32 1.1754944e-38, %v717
        %v719 = vsel %vm716, %v718, %v714
        %v720 = vmul.f32 1.0, %v719
        %722 = vset.pattern.permute.xlu0 0
        %723 = vperm.xlu0 %722, %v720
        %v724 = vpop.permute.xlu0 %723
        %v726 = vmul.f32 %v704, %v724
        %v727 = vld [vmem:[%s498] sm:$0xff]
        %v728 = vld [vmem:[%s463] sm:$0xff]
        %v729 = vrcp.pop %v728
        %v730 = vmul.f32 %v728, %v729
        %v731 = vsub.f32 1.0, %v730
        %v732 = vmul.f32 %v729, %v731
        %v733 = vadd.f32 %v729, %v732
        %vm734 = vweird.f32 %v728
        %vm735 = vweird.f32 %v729
        %vm736 = vmor %vm734, %vm735
        %v737 = vsel %vm736, %v729, %v733
        %v738 = vand.u32 2147483647, %v728
        %vm739 = vcmp.eq.f32.partialorder %v738, 8.507059e+37
        %v740 = vand.u32 %v728, 2147483648
        %v741 = vor.u32 1.1754944e-38, %v740
        %v742 = vsel %vm739, %v741, %v737
        %v743 = vmul.f32 1.0, %v742
        %745 = vset.pattern.permute.xlu0 0
        %746 = vperm.xlu0 %745, %v743
        %v747 = vpop.permute.xlu0 %746
        %v749 = vmul.f32 %v727, %v747
        %v750 = vld [vmem:[%s594] sm:$0xff]
        %v751 = vld [vmem:[%s559] sm:$0xff]
        %v752 = vrcp.pop %v751
        %v753 = vmul.f32 %v751, %v752
        %v754 = vsub.f32 1.0, %v753
        %v755 = vmul.f32 %v752, %v754
        %v756 = vadd.f32 %v752, %v755
        %vm757 = vweird.f32 %v751
        %vm758 = vweird.f32 %v752
        %vm759 = vmor %vm757, %vm758
        %v760 = vsel %vm759, %v752, %v756
        %v761 = vand.u32 2147483647, %v751
        %vm762 = vcmp.eq.f32.partialorder %v761, 8.507059e+37
        %v763 = vand.u32 %v751, 2147483648
        %v764 = vor.u32 1.1754944e-38, %v763
        %v765 = vsel %vm762, %v764, %v760
        %v766 = vmul.f32 1.0, %v765
        %768 = vset.pattern.permute.xlu0 0
        %769 = vperm.xlu0 %768, %v766
        %v770 = vpop.permute.xlu0 %769
        %v772 = vmul.f32 %v750, %v770
        %v773 = vld [vmem:[%s690] sm:$0xff]
        %v774 = vld [vmem:[%s655] sm:$0xff]
        %v775 = vrcp.pop %v774
        %v776 = vmul.f32 %v774, %v775
        %v777 = vsub.f32 1.0, %v776
        %v778 = vmul.f32 %v775, %v777
        %v779 = vadd.f32 %v775, %v778
        %vm780 = vweird.f32 %v774
        %vm781 = vweird.f32 %v775
        %vm782 = vmor %vm780, %vm781
        %v783 = vsel %vm782, %v775, %v779
        %v784 = vand.u32 2147483647, %v774
        %vm785 = vcmp.eq.f32.partialorder %v784, 8.507059e+37
        %v786 = vand.u32 %v774, 2147483648
        %v787 = vor.u32 1.1754944e-38, %v786
        %v788 = vsel %vm785, %v787, %v783
        %v789 = vmul.f32 1.0, %v788
        %791 = vset.pattern.permute.xlu0 0
        %792 = vperm.xlu0 %791, %v789
        %v793 = vpop.permute.xlu0 %792
        %v795 = vmul.f32 %v773, %v793
        %797 = vrot.lane.b32.xlu0 %v749, 8
        %v798 = vpop.permute.xlu0 %797
        %801 = vrot.lane.b32.xlu0 %v772, 16
        %v802 = vpop.permute.xlu0 %801
        %805 = vrot.lane.b32.xlu0 %v795, 24
        %v806 = vpop.permute.xlu0 %805
        %v808 = vsel %vm329, %v726, %v798
        %vm809 = vcmask 130048
        %v810 = vsel %vm809, %v808, %v802
        %vm811 = vcmask 195584
        %v812 = vsel %vm811, %v810, %v806
        %vm813 = vcmask 261120
        %814 = vst.msk [vmem:[%s307] sm:$0xff] %vm813, %v812
      $region40: #{causal_cross_attention.6} parent=31 // pred_fallthru
        _
      %p815 = scmp.lt.s32.totalorder %s20, 1
      %s816 = scalar_select %p815, %s20, 1
      %p817 = scmp.lt.s32.totalorder %s22, 0
      %s818 = scalar_select %p817, %s22, 0
      %p819 = scmp.lt.s32.totalorder %s21, 0
      %s820 = scalar_select %p819, %s21, 0
      %s821 = sadd.s32 %s820, %s818
      %s822 = sadd.s32 %s821, %s816
      %s823 = smul.addr %s822, 8
      %s824 = scalar_lea.vmem %s3, %s823
      // Predicated region
      $region41: #{causal_cross_attention.6} parent=31 // pred_check
        %p825 = pneg %p152
      $region42: #{causal_cross_attention.6} parent=31 // pred_check_branch
        %827 = sbr.rel (%p825) target = $region44
      $region43: #{causal_cross_attention.6} parent=31 // pred_region
        _
      $region44: #{causal_cross_attention.6} parent=31 // pred_fallthru
        _
    $region32: #{causal_cross_attention.6} parent=5 // pred_fallthru
      _
    %p828 = scmp.le.s32.totalorder 2, %s9
    // Predicated region
    $region45: #{causal_cross_attention.6} parent=5 // pred_check
      %p829 = pneg %p828
    $region46: #{causal_cross_attention.6} parent=5 // pred_check_branch
      %831 = sbr.rel (%p829) target = $region48
    $region47: #{causal_cross_attention.6} parent=5 // pred_region
      %s832 = ssub.s32 %s9, 2
      // Predicated region
      $region49: #{causal_cross_attention.6} parent=47 // pred_check
        %p833 = pneg %p158
      $region50: #{causal_cross_attention.6} parent=47 // pred_check_branch
        %835 = sbr.rel (%p833) target = $region52
      $region51: #{causal_cross_attention.6} parent=47 // pred_region
        %p836 = scmp.lt.s32.totalorder %s24, 1
        %s837 = scalar_select %p836, %s24, 1
        %p838 = scmp.lt.s32.totalorder %s26, 0
        %s839 = scalar_select %p838, %s26, 0
        %p840 = scmp.lt.s32.totalorder %s25, 0
        %s841 = scalar_select %p840, %s25, 0
        %s842 = sadd.s32 %s841, %s839
        %s843 = sadd.s32 %s842, %s837
        %s844 = smul.addr %s843, 8
        %s845 = scalar_lea.vmem %s3, %s844
      $region52: #{causal_cross_attention.6} parent=47 // pred_fallthru
        _
    $region48: #{causal_cross_attention.6} parent=5 // pred_fallthru
      _
  $region6: #{causal_cross_attention.6} parent=0 // loop_footer
    %s13 = sadd.s32 1, %s9
  $region7: #{causal_cross_attention.6} parent=0 // loop_footer_branch
    %8 = sbr.rel target = $region3
  $region8: #{causal_cross_attention.6} parent=0 // loop_exit
    _

</llo_original>
